<compile_context>
chip_gen: v6e
topology: v6e:2x2x1
jax: 0.10.0
libtpu: 0.0.40
codegen_flags: <defaults>
</compile_context>

<pallas_src>
import functools

import jax
import jax.numpy as jnp
from jax.experimental import pallas as pl
from jax.experimental.pallas import tpu as pltpu


def _stats_kernel(patches_ref, w_ref, stats_ref):
    """Pass 1: per-core partial per-channel sum and sum-of-squares of conv output."""
    @pl.when(pl.program_id(1) == 0)
    def _init():
        stats_ref[...] = jnp.zeros_like(stats_ref)

    y = jnp.dot(patches_ref[...], w_ref[...], preferred_element_type=jnp.float32)
    s = jnp.sum(y, axis=0, keepdims=True)        # (1, Cp)
    ss = jnp.sum(y * y, axis=0, keepdims=True)   # (1, Cp)
    # Single fused RMW of the resident (2, Cp) accumulator block.
    stats_ref[...] += jnp.concatenate([s, ss], axis=0)


def _apply_kernel(alpha_ref, patches_ref, w_ref, scale_ref, shift_ref, out_ref):
    """Pass 2: conv matmul + folded BN (scale/shift) + fused PReLU, bf16 store."""
    y = jnp.dot(patches_ref[...], w_ref[...], preferred_element_type=jnp.float32)
    z = y * scale_ref[...] + shift_ref[...]
    a = alpha_ref[0]
    out_ref[...] = (jnp.maximum(z, 0.0) + a * jnp.minimum(z, 0.0)).astype(out_ref.dtype)


def _im2col_nchw(x, kh, kw, stride, padding):
    """x: (N, C, H, W) -> patches (N*OH*OW, C*kh*kw), matching OIHW weight flatten."""
    n, c, h, w = x.shape
    xp = jnp.pad(x, ((0, 0), (0, 0), (padding, padding), (padding, padding)))
    oh = (h + 2 * padding - kh) // stride + 1
    ow = (w + 2 * padding - kw) // stride + 1
    cols = []
    for i in range(kh):
        for j in range(kw):
            cols.append(xp[:, :, i:i + stride * oh:stride, j:j + stride * ow:stride])
    p = jnp.stack(cols, axis=0).reshape(kh, kw, n, c, oh, ow)
    p = jnp.transpose(p, (2, 4, 5, 3, 0, 1))  # (N, OH, OW, C, kh, kw)
    return p.reshape(n * oh * ow, c * kh * kw), oh, ow


def _round_up(v, m):
    return (v + m - 1) // m * m


def _vmem_limit_bytes():
    """Generation-aware scoped-VMEM budget: ~48 MiB on v7x (64 MiB/core), ~96 MiB on v5e/v6e."""
    cap = 0
    try:
        cap = int(getattr(pltpu.get_tpu_info(), "vmem_capacity_bytes", 0))
    except Exception:
        cap = 0
    if cap <= 0:
        cap = 64 * 1024 * 1024  # conservative (v7x-sized) fallback
    return min(cap * 3 // 4, 100 * 1024 * 1024)


@functools.partial(jax.jit, static_argnames=("stride", "padding", "tm"))
def cbr_forward(x, conv_w, gamma, beta, prelu_alpha, *, stride=1, padding=1, tm=1024):
    """x: (N, Cin, H, W) NCHW. conv_w: (Cout, Cin, kh, kw) OIHW. Returns NCHW f32."""
    n, cin, h, w = x.shape
    cout, _, kh, kw = conv_w.shape
    eps = 1e-5

    # im2col in bf16 (halves HBM traffic of the dominant patches array).
    # NOTE: conv operands are bf16 (f32 MXU accumulation), matching _reference.
    patches, oh, ow = _im2col_nchw(x.astype(jnp.bfloat16), kh, kw, stride, padding)
    m, k = patches.shape
    cp = _round_up(cout, 128)        # lane-dense output channels (unmasked vst)

    # ---- VMEM budget -> clamp tm (keeps deep pipelining without spilling on v7x).
    vmem_limit = _vmem_limit_bytes()
    k_lanes = _round_up(k, 128)      # VMEM lane padding of a patches tile
    per_row = 2 * k_lanes * 2 + 2 * cp * 2 + cp * 4   # dbl-buf patches + dbl-buf bf16 out + f32 temp
    fixed = 2 * _round_up(k, 8) * cp * 2 + 64 * 1024  # dbl-buf weight + slack
    tm_cap = max(256, ((vmem_limit * 3 // 4 - fixed) // per_row) // 8 * 8)

    tm = max(8, (tm // 8) * 8)                 # multiple of 8 (sublane)
    tm = min(tm, tm_cap, _round_up(m, 8))      # no bigger than the data / VMEM budget

    num_tiles = (m + tm - 1) // tm
    ncores = 2 if num_tiles >= 2 else 1        # v7x megacore split of the stats pass
    tiles_per_core = (num_tiles + ncores - 1) // ncores
    num_tiles = ncores * tiles_per_core
    m_pad = num_tiles * tm

    # Pad only M (zero rows contribute exactly 0 to the BN sums). K is NOT padded.
    patches = jnp.pad(patches, ((0, m_pad - m), (0, 0)))
    w2d = conv_w.reshape(cout, k).T.astype(jnp.bfloat16)   # (K, Cout), OIHW flatten order
    w2d = jnp.pad(w2d, ((0, 0), (0, cp - cout)))            # (K, Cp)

    flops = 2 * m_pad * k * cp
    patch_bytes = m_pad * k * 2
    w_bytes = k * cp * 2

    # ---- Pass 1: global per-channel sum / sum-of-squares (reduction over M).
    stats_parts = pl.pallas_call(
        _stats_kernel,
        out_shape=jax.ShapeDtypeStruct((ncores, 2, cp), jnp.float32),
        grid=(ncores, tiles_per_core),
        in_specs=[
            pl.BlockSpec((tm, k), lambda c, i: (c * tiles_per_core + i, 0)),  # patches tile
            pl.BlockSpec((k, cp), lambda c, i: (0, 0)),                       # weight (resident)
        ],
        out_specs=pl.BlockSpec((None, 2, cp), lambda c, i: (c, 0, 0)),        # per-core partials
        compiler_params=pltpu.CompilerParams(
            dimension_semantics=("parallel", "arbitrary"),
            vmem_limit_bytes=vmem_limit),
        cost_estimate=pl.CostEstimate(
            flops=flops, transcendentals=0,
            bytes_accessed=patch_bytes + w_bytes + ncores * 2 * cp * 4),
    )(patches, w2d)
    stats = jnp.sum(stats_parts, axis=0)       # (2, Cp): reduce the per-core partials

    # Fold BatchNorm (training-mode batch stats, biased variance, eps=1e-5) into a
    # single per-channel scale/shift. Divide by the TRUE M (padding adds only zeros).
    mean = stats[0] / float(m)
    var = jnp.maximum(stats[1] / float(m) - mean * mean, 0.0)
    inv = jax.lax.rsqrt(var + eps)
    gamma_p = jnp.pad(gamma.astype(jnp.float32), (0, cp - cout))
    beta_p = jnp.pad(beta.astype(jnp.float32), (0, cp - cout))
    scale = (gamma_p * inv).reshape(1, cp)
    shift = (beta_p - mean * gamma_p * inv).reshape(1, cp)

    # ---- Pass 2: recompute the cheap matmul, apply scale/shift + fused PReLU (bf16 out).
    # (If profiling shows exposed DMA, bump the patches spec to pipeline_mode=pl.Buffered(3).)
    out_flat = pl.pallas_call(
        _apply_kernel,
        out_shape=jax.ShapeDtypeStruct((m_pad, cp), jnp.bfloat16),
        grid=(num_tiles,),
        in_specs=[
            pl.BlockSpec(memory_space=pltpu.SMEM),       # PReLU alpha (scalar)
            pl.BlockSpec((tm, k), lambda i: (i, 0)),     # patches tile (bf16, unpadded K)
            pl.BlockSpec((k, cp), lambda i: (0, 0)),     # weight (bf16)
            pl.BlockSpec((1, cp), lambda i: (0, 0)),     # folded BN scale
            pl.BlockSpec((1, cp), lambda i: (0, 0)),     # folded BN shift
        ],
        out_specs=pl.BlockSpec((tm, cp), lambda i: (i, 0)),
        compiler_params=pltpu.CompilerParams(
            dimension_semantics=("parallel",),
            vmem_limit_bytes=vmem_limit),
        cost_estimate=pl.CostEstimate(
            flops=flops, transcendentals=0,
            bytes_accessed=patch_bytes + w_bytes + m_pad * cp * 2 + 2 * cp * 4),
    )(prelu_alpha, patches, w2d, scale, shift)

    # (M, Cout) -> (N, OH, OW, Cout) -> NCHW f32 (parity with the PyTorch module).
    out = out_flat[:m, :cout].reshape(n, oh, ow, cout)
    return jnp.transpose(out, (0, 3, 1, 2)).astype(jnp.float32)


def _reference(x, conv_w, gamma, beta, prelu_alpha, stride, padding):
    # Same bf16 conv operands / f32 accumulation as the kernel; BN + PReLU in f32.
    y = jax.lax.conv_general_dilated(
        x.astype(jnp.bfloat16), conv_w.astype(jnp.bfloat16),
        window_strides=(stride, stride),
        padding=[(padding, padding), (padding, padding)],
        dimension_numbers=("NCHW", "OIHW", "NCHW"),
        preferred_element_type=jnp.float32)
    mean = jnp.mean(y, axis=(0, 2, 3), keepdims=True)
    var = jnp.mean((y - mean) ** 2, axis=(0, 2, 3), keepdims=True)
    y = (y - mean) * jax.lax.rsqrt(var + 1e-5)
    y = y * gamma.reshape(1, -1, 1, 1) + beta.reshape(1, -1, 1, 1)
    a = prelu_alpha[0]
    return jnp.where(y > 0, y, a * y)


if __name__ == "__main__":
    # Shapes consistent with CBR(in_channel=4, out_channel=8, k=3, s=1, padding=1)
    N, CIN, H, W = 2, 4, 16, 16
    COUT, K, S, P = 8, 3, 1, 1

    key = jax.random.PRNGKey(0)
    kx, kw_, kg, kb = jax.random.split(key, 4)

    x = jax.random.normal(kx, (N, CIN, H, W), dtype=jnp.float32)
    conv_w = jax.random.normal(kw_, (COUT, CIN, K, K), dtype=jnp.float32) * 0.1
    gamma = 1.0 + 0.1 * jax.random.normal(kg, (COUT,), dtype=jnp.float32)
    beta = 0.1 * jax.random.normal(kb, (COUT,), dtype=jnp.float32)
    prelu_alpha = jnp.array([0.25], dtype=jnp.float32)  # nn.PReLU() default init

    # M = N*OH*OW = 512; tm=256 -> 2 M-tiles, exercising the 2-way core-split
    # stats reduction and the pl.when init path (production default stays tm=1024).
    out = cbr_forward(x, conv_w, gamma, beta, prelu_alpha, stride=S, padding=P, tm=256)
    out = jax.block_until_ready(out)

    ref = _reference(x, conv_w, gamma, beta, prelu_alpha, S, P)
    assert out.shape == (N, COUT, H, W)
    # Pass 2 stores bf16 (perf): tolerance covers the bf16 rounding of the output.
    assert jnp.allclose(out, ref, atol=2e-2, rtol=2e-2), "mismatch vs reference"

    print("KERNEL_OK")
</pallas_src>

<mosaic_0001>
module attributes {stable_mosaic.version = 11 : i64} {
  func.func @_apply_kernel(%arg0: i32, %arg1: memref<1xf32, #tpu.memory_space<smem>>, %arg2: memref<256x36xbf16, #tpu.memory_space<vmem>>, %arg3: memref<36x128xbf16, #tpu.memory_space<vmem>>, %arg4: memref<1x128xf32, #tpu.memory_space<vmem>>, %arg5: memref<1x128xf32, #tpu.memory_space<vmem>>, %arg6: memref<256x128xbf16, #tpu.memory_space<vmem>>) attributes {dimension_semantics = [#tpu.dimension_semantics<parallel>], iteration_bounds = array<i64: 2>, scalar_prefetch = 0 : i64, scratch_operands = 0 : i64, tpu.core_type = #tpu.core_type<tc>, window_params = [{transform_indices = @transform_0, window_bounds = array<i64: 1>}, {transform_indices = @transform_1, window_bounds = array<i64: 256, 36>}, {pipeline_mode = #tpu.pipeline_mode<synchronous>, transform_indices = @transform_2, window_bounds = array<i64: 36, 128>}, {pipeline_mode = #tpu.pipeline_mode<synchronous>, transform_indices = @transform_3, window_bounds = array<i64: 1, 128>}, {pipeline_mode = #tpu.pipeline_mode<synchronous>, transform_indices = @transform_4, window_bounds = array<i64: 1, 128>}, {transform_indices = @transform_5, window_bounds = array<i64: 256, 128>}]} {
    %c0 = arith.constant 0 : index
    %c0_0 = arith.constant 0 : index
    %0 = vector.load %arg2[%c0, %c0_0] : memref<256x36xbf16, #tpu.memory_space<vmem>>, vector<256x36xbf16>
    %c0_1 = arith.constant 0 : index
    %c0_2 = arith.constant 0 : index
    %1 = vector.load %arg3[%c0_1, %c0_2] : memref<36x128xbf16, #tpu.memory_space<vmem>>, vector<36x128xbf16>
    %cst = arith.constant dense<0.000000e+00> : vector<256x128xf32>
    %2 = tpu.matmul %0, %1, %cst {dimension_numbers = #tpu.dot_dimension_numbers<[1], [0], [0], [1], [0, 0, 1, 1], [], []>} : vector<256x36xbf16>, vector<36x128xbf16>, vector<256x128xf32> -> vector<256x128xf32>
    %c0_3 = arith.constant 0 : index
    %c0_4 = arith.constant 0 : index
    %3 = vector.load %arg4[%c0_3, %c0_4] : memref<1x128xf32, #tpu.memory_space<vmem>>, vector<1x128xf32>
    %4 = vector.broadcast %3 : vector<1x128xf32> to vector<256x128xf32>
    %5 = arith.mulf %2, %4 : vector<256x128xf32>
    %c0_5 = arith.constant 0 : index
    %c0_6 = arith.constant 0 : index
    %6 = vector.load %arg5[%c0_5, %c0_6] : memref<1x128xf32, #tpu.memory_space<vmem>>, vector<1x128xf32>
    %7 = vector.broadcast %6 : vector<1x128xf32> to vector<256x128xf32>
    %8 = arith.addf %5, %7 : vector<256x128xf32>
    %c0_7 = arith.constant 0 : index
    %9 = memref.load %arg1[%c0_7] : memref<1xf32, #tpu.memory_space<smem>>
    %cst_8 = arith.constant 0.000000e+00 : f32
    %10 = vector.broadcast %cst_8 : f32 to vector<256x128xf32>
    %11 = arith.maximumf %8, %10 : vector<256x128xf32>
    %cst_9 = arith.constant 0.000000e+00 : f32
    %12 = vector.broadcast %cst_9 : f32 to vector<256x128xf32>
    %13 = arith.minimumf %8, %12 : vector<256x128xf32>
    %14 = vector.broadcast %9 : f32 to vector<256x128xf32>
    %15 = arith.mulf %14, %13 : vector<256x128xf32>
    %16 = arith.addf %11, %15 : vector<256x128xf32>
    %17 = arith.truncf %16 : vector<256x128xf32> to vector<256x128xbf16>
    %c0_10 = arith.constant 0 : index
    %c0_11 = arith.constant 0 : index
    %18 = vector.load %arg6[%c0_10, %c0_11] : memref<256x128xbf16, #tpu.memory_space<vmem>>, vector<256x128xbf16>
    tpu.vector_store %arg6[%c0_10, %c0_11], %17 {strides = array<i32>} : memref<256x128xbf16, #tpu.memory_space<vmem>>, vector<256x128xbf16>,
    return
  }
  func.func @transform_0(%arg0: i32) -> i32 {
    %c0_i32 = arith.constant 0 : i32
    %c0_i32_0 = arith.constant 0 : i32
    return %c0_i32 : i32
  }
  func.func @transform_1(%arg0: i32) -> (i32, i32) {
    %c0_i32 = arith.constant 0 : i32
    %c0_i32_0 = arith.constant 0 : i32
    return %arg0, %c0_i32 : i32, i32
  }
  func.func @transform_2(%arg0: i32) -> (i32, i32) {
    %c0_i32 = arith.constant 0 : i32
    %c0_i32_0 = arith.constant 0 : i32
    %c0_i32_1 = arith.constant 0 : i32
    return %c0_i32, %c0_i32_0 : i32, i32
  }
  func.func @transform_3(%arg0: i32) -> (i32, i32) {
    %c0_i32 = arith.constant 0 : i32
    %c0_i32_0 = arith.constant 0 : i32
    %c0_i32_1 = arith.constant 0 : i32
    return %c0_i32, %c0_i32_0 : i32, i32
  }
  func.func @transform_4(%arg0: i32) -> (i32, i32) {
    %c0_i32 = arith.constant 0 : i32
    %c0_i32_0 = arith.constant 0 : i32
    %c0_i32_1 = arith.constant 0 : i32
    return %c0_i32, %c0_i32_0 : i32, i32
  }
  func.func @transform_5(%arg0: i32) -> (i32, i32) {
    %c0_i32 = arith.constant 0 : i32
    %c0_i32_0 = arith.constant 0 : i32
    return %arg0, %c0_i32 : i32, i32
  }
}

module attributes {stable_mosaic.version = 11 : i64} {
  func.func @_stats_kernel(%arg0: i32, %arg1: i32, %arg2: memref<256x36xbf16, #tpu.memory_space<vmem>>, %arg3: memref<36x128xbf16, #tpu.memory_space<vmem>>, %arg4: memref<1x2x128xf32, #tpu.memory_space<vmem>>) attributes {dimension_semantics = [#tpu.dimension_semantics<parallel>, #tpu.dimension_semantics<arbitrary>], iteration_bounds = array<i64: 2, 1>, scalar_prefetch = 0 : i64, scratch_operands = 0 : i64, tpu.core_type = #tpu.core_type<tc>, window_params = [{transform_indices = @transform_0, window_bounds = array<i64: 256, 36>}, {pipeline_mode = #tpu.pipeline_mode<synchronous>, transform_indices = @transform_1, window_bounds = array<i64: 36, 128>}, {transform_indices = @transform_2, window_bounds = array<i64: 1, 2, 128>}]} {
    %c0_i32 = arith.constant 0 : i32
    %0 = arith.cmpi eq, %arg1, %c0_i32 : i32
    %1 = arith.extui %0 : i1 to i32
    %c0_i32_0 = arith.constant 0 : i32
    %2 = arith.cmpi ne, %1, %c0_i32_0 : i32
    scf.if %2 {
      %cst_12 = arith.constant 0.000000e+00 : f32
      %18 = vector.broadcast %cst_12 : f32 to vector<2x128xf32>
      %c0_13 = arith.constant 0 : index
      %c0_14 = arith.constant 0 : index
      %c0_15 = arith.constant 0 : index
      %19 = vector.load %arg4[%c0_13, %c0_14, %c0_15] : memref<1x2x128xf32, #tpu.memory_space<vmem>>, vector<1x2x128xf32>
      %20 = vector.shape_cast %19 : vector<1x2x128xf32> to vector<2x128xf32>
      %21 = vector.shape_cast %18 : vector<2x128xf32> to vector<1x2x128xf32>
      tpu.vector_store %arg4[%c0_13, %c0_14, %c0_15], %21 {strides = array<i32>} : memref<1x2x128xf32, #tpu.memory_space<vmem>>, vector<1x2x128xf32>,
    } else {
    }
    %c0 = arith.constant 0 : index
    %c0_1 = arith.constant 0 : index
    %3 = vector.load %arg2[%c0, %c0_1] : memref<256x36xbf16, #tpu.memory_space<vmem>>, vector<256x36xbf16>
    %c0_2 = arith.constant 0 : index
    %c0_3 = arith.constant 0 : index
    %4 = vector.load %arg3[%c0_2, %c0_3] : memref<36x128xbf16, #tpu.memory_space<vmem>>, vector<36x128xbf16>
    %cst = arith.constant dense<0.000000e+00> : vector<256x128xf32>
    %5 = tpu.matmul %3, %4, %cst {dimension_numbers = #tpu.dot_dimension_numbers<[1], [0], [0], [1], [0, 0, 1, 1], [], []>} : vector<256x36xbf16>, vector<36x128xbf16>, vector<256x128xf32> -> vector<256x128xf32>
    %cst_4 = arith.constant dense<0.000000e+00> : vector<128xf32>
    %6 = vector.multi_reduction <add>, %5, %cst_4 [0] : vector<256x128xf32> to vector<128xf32>
    %7 = vector.shape_cast %6 : vector<128xf32> to vector<1x128xf32>
    %8 = arith.mulf %5, %5 : vector<256x128xf32>
    %cst_5 = arith.constant dense<0.000000e+00> : vector<128xf32>
    %9 = vector.multi_reduction <add>, %8, %cst_5 [0] : vector<256x128xf32> to vector<128xf32>
    %10 = vector.shape_cast %9 : vector<128xf32> to vector<1x128xf32>
    %c0_6 = arith.constant 0 : index
    %c0_7 = arith.constant 0 : index
    %c0_8 = arith.constant 0 : index
    %11 = vector.load %arg4[%c0_6, %c0_7, %c0_8] : memref<1x2x128xf32, #tpu.memory_space<vmem>>, vector<1x2x128xf32>
    %12 = vector.shape_cast %11 : vector<1x2x128xf32> to vector<2x128xf32>
    %13 = tpu.concatenate %7, %10 in 0 : vector<1x128xf32>, vector<1x128xf32> -> vector<2x128xf32>
    %14 = arith.addf %12, %13 : vector<2x128xf32>
    %c0_9 = arith.constant 0 : index
    %c0_10 = arith.constant 0 : index
    %c0_11 = arith.constant 0 : index
    %15 = vector.load %arg4[%c0_9, %c0_10, %c0_11] : memref<1x2x128xf32, #tpu.memory_space<vmem>>, vector<1x2x128xf32>
    %16 = vector.shape_cast %15 : vector<1x2x128xf32> to vector<2x128xf32>
    %17 = vector.shape_cast %14 : vector<2x128xf32> to vector<1x2x128xf32>
    tpu.vector_store %arg4[%c0_9, %c0_10, %c0_11], %17 {strides = array<i32>} : memref<1x2x128xf32, #tpu.memory_space<vmem>>, vector<1x2x128xf32>,
    return
  }
  func.func @transform_0(%arg0: i32, %arg1: i32) -> (i32, i32) {
    %c1_i32 = arith.constant 1 : i32
    %0 = arith.muli %arg0, %c1_i32 : i32
    %1 = arith.addi %0, %arg1 : i32
    %c0_i32 = arith.constant 0 : i32
    %c0_i32_0 = arith.constant 0 : i32
    return %1, %c0_i32 : i32, i32
  }
  func.func @transform_1(%arg0: i32, %arg1: i32) -> (i32, i32) {
    %c0_i32 = arith.constant 0 : i32
    %c0_i32_0 = arith.constant 0 : i32
    %c0_i32_1 = arith.constant 0 : i32
    return %c0_i32, %c0_i32_0 : i32, i32
  }
  func.func @transform_2(%arg0: i32, %arg1: i32) -> (i32, i32, i32) {
    %c0_i32 = arith.constant 0 : i32
    %c0_i32_0 = arith.constant 0 : i32
    %c0_i32_1 = arith.constant 0 : i32
    return %arg0, %c0_i32, %c0_i32_0 : i32, i32, i32
  }
}

</mosaic_0001>

<llo_original>
// kernel: cbr_forward.2
$region0: #{cbr_forward.2}
  #allocation0 [shape = 'u32[]', space=smem, size = 0x4, offset = 0x4, fixed_abs, tag = 'smem constant byte address 0x4 - core index']
  #allocation1 [shape = 'u32[144,128]{1,0:T(1,128)}', space=vmem, size = 0x12000, scoped, tag = 'internal scratch']
  %s0 = inlined_call_operand.vmem [shape: bf16[512,36], index: 0, kind: input, shape index: {}]
  %s1 = inlined_call_operand.vmem [shape: bf16[36,128], index: 1, kind: input, shape index: {}]
  %s2 = inlined_call_operand.vmem [shape: f32[2,2,128], index: 2, kind: output, shape index: {}]
  %s3 = sld [smem:[#allocation0]]
  $region45: #{cbr_forward.2} parent=0
    _
  %s5 = ssub.s32 1, %s3
  %s6 = scalar_select 0, %s5, %s3
  loop: start=0, step=1, limit=4
  $region2: #{cbr_forward.2} parent=0 // loop_pre_header
    _
  $region3: #{cbr_forward.2} parent=0 // loop_header
    %s8 = sphi 0, %s12
    %p9 = scmp.ge.s32.totalorder %s8, 4
    %s15 = sphi 0, %s27
    %s16 = sphi 0, %s23
    %s17 = sphi 0, %s15
    %s18 = sphi 0, %s16
    %s19 = sphi 0, %s17
    %s20 = sphi 0, %s18
    %s32 = sphi 0, %s34
    %s35 = sphi 0, %s32
    %s36 = sphi 0, %s35
    %s52 = sphi 0, %s36
    %s56 = sphi 0, %s56
    %s58 = sphi 0, %s56
    %s59 = sphi 0, %s58
    %s73 = sphi 0, %s59
    %s79 = sphi 0, %s81
    %s82 = sphi 0, %s79
    %s83 = sphi 0, %s82
    %s99 = sphi 0, %s83
  $region4: #{cbr_forward.2} parent=0 // loop_header_branch
    %11 = sbr.rel (%p9) target = $region8
  $region5: #{cbr_forward.2} parent=0 // loop_body
    %s13 = ssub.s32 %s8, 1
    %s14 = ssub.s32 %s8, 2
    %s21 = sadd.s32 1, %s16
    %p22 = scmp.ge.s32.totalorder %s21, 1
    %s23 = scalar_select %p22, 0, %s21
    %s24 = sadd.s32 1, %s15
    %s25 = scalar_select %p22, %s24, %s15
    %p26 = scmp.ge.s32.totalorder %s25, 2
    %s27 = scalar_select %p26, 0, %s25
    %s28 = sadd.s32 %s15, %s16
    %s29 = sadd.s32 %s27, %s23
    %s30 = ssub.s32 %s28, %s29
    %p31 = scmp.eq.s32.totalorder %s30, 0
    %s33 = sadd.s32 %s32, 1
    %s34 = scalar_select %p31, %s32, %s33
    %p37 = pneg %p31
    %p38 = scmp.eq.s32.totalorder %s8, 1
    %p39 = por %p37, %p38
    %p40 = scmp.ne.s32.totalorder %s32, %s35
    %p41 = scmp.eq.s32.totalorder %s8, 0
    %p42 = por %p40, %p41
    %p43 = scmp.ne.s32.totalorder %s32, %s35
    %p44 = scmp.eq.s32.totalorder %s13, 1
    %p45 = por %p43, %p44
    %p46 = scmp.ne.s32.totalorder %s35, %s36
    %p47 = scmp.eq.s32.totalorder %s13, 0
    %p48 = por %p46, %p47
    %p49 = scmp.ne.s32.totalorder %s35, %s36
    %p50 = scmp.eq.s32.totalorder %s14, 1
    %p51 = por %p49, %p50
    %p53 = scmp.ne.s32.totalorder %s36, %s52
    %p54 = scmp.eq.s32.totalorder %s14, 0
    %p55 = por %p53, %p54
    %s57 = sadd.s32 %s56, 1
    %p60 = scmp.eq.s32.totalorder %s8, 1
    %p61 = scmp.ne.s32.totalorder %s56, %s58
    %p62 = scmp.eq.s32.totalorder %s8, 0
    %p63 = por %p61, %p62
    %p64 = scmp.ne.s32.totalorder %s56, %s58
    %p65 = scmp.eq.s32.totalorder %s13, 1
    %p66 = por %p64, %p65
    %p67 = scmp.ne.s32.totalorder %s58, %s59
    %p68 = scmp.eq.s32.totalorder %s13, 0
    %p69 = por %p67, %p68
    %p70 = scmp.ne.s32.totalorder %s58, %s59
    %p71 = scmp.eq.s32.totalorder %s14, 1
    %p72 = por %p70, %p71
    %p74 = scmp.ne.s32.totalorder %s59, %s73
    %p75 = scmp.eq.s32.totalorder %s14, 0
    %p76 = por %p74, %p75
    %s77 = ssub.s32 %s15, %s27
    %p78 = scmp.eq.s32.totalorder %s77, 0
    %s80 = sadd.s32 %s79, 1
    %s81 = scalar_select %p78, %s79, %s80
    %p84 = pneg %p78
    %p85 = scmp.eq.s32.totalorder %s8, 1
    %p86 = por %p84, %p85
    %p87 = scmp.ne.s32.totalorder %s79, %s82
    %p88 = scmp.eq.s32.totalorder %s8, 0
    %p89 = por %p87, %p88
    %p90 = scmp.ne.s32.totalorder %s79, %s82
    %p91 = scmp.eq.s32.totalorder %s13, 1
    %p92 = por %p90, %p91
    %p93 = scmp.ne.s32.totalorder %s82, %s83
    %p94 = scmp.eq.s32.totalorder %s13, 0
    %p95 = por %p93, %p94
    %p96 = scmp.ne.s32.totalorder %s82, %s83
    %p97 = scmp.eq.s32.totalorder %s14, 1
    %p98 = por %p96, %p97
    %p100 = scmp.ne.s32.totalorder %s83, %s99
    %p101 = scmp.eq.s32.totalorder %s14, 0
    %p102 = por %p100, %p101
    %p103 = scmp.le.s32.totalorder 1, %s8
    %p104 = scmp.lt.s32.totalorder %s8, 3
    %p105 = pnand %p103, %p104
    %p106 = pneg %p105
    // Predicated region
    $region9: #{cbr_forward.2} parent=5 // pred_check
      _
    $region10: #{cbr_forward.2} parent=5 // pred_check_branch
      %108 = sbr.rel (%p105) target = $region12
    $region11: #{cbr_forward.2} parent=5 // pred_region
      %s109 = ssub.s32 %s8, 1
      // Predicated region
      $region13: #{cbr_forward.2} parent=11 // pred_check
        %p110 = pneg %p69
      $region14: #{cbr_forward.2} parent=11 // pred_check_branch
        %112 = sbr.rel (%p110) target = $region16
      $region15: #{cbr_forward.2} parent=11 // pred_region
        _
      $region16: #{cbr_forward.2} parent=11 // pred_fallthru
        _
    $region12: #{cbr_forward.2} parent=5 // pred_fallthru
      _
    %p113 = scmp.lt.s32.totalorder %s8, 2
    // Predicated region
    $region17: #{cbr_forward.2} parent=5 // pred_check
      %p114 = pneg %p113
    $region18: #{cbr_forward.2} parent=5 // pred_check_branch
      %116 = sbr.rel (%p114) target = $region20
    $region19: #{cbr_forward.2} parent=5 // pred_region
      // Predicated region
      $region21: #{cbr_forward.2} parent=19 // pred_check
        %p117 = pneg %p42
      $region22: #{cbr_forward.2} parent=19 // pred_check_branch
        %119 = sbr.rel (%p117) target = $region24
      $region23: #{cbr_forward.2} parent=19 // pred_region
        %s120 = sadd.s32 %s15, %s16
        %s121 = smul.u32 32, %s120
        %p122 = scmp.lt.s32.totalorder %s121, 63
        %s123 = scalar_select %p122, %s121, 63
        %s124 = smul.addr %s123, 4
        %s125 = scalar_lea.vmem %s0, %s124
        %s126 = sadd.s32 %s15, %s16
        %s127 = smul.u32 32, %s126
      $region24: #{cbr_forward.2} parent=19 // pred_fallthru
        _
    $region20: #{cbr_forward.2} parent=5 // pred_fallthru
      _
    %p128 = scmp.le.s32.totalorder 1, %s8
    %p129 = scmp.lt.s32.totalorder %s8, 3
    %p130 = pnand %p128, %p129
    %p131 = pneg %p130
    // Predicated region
    $region25: #{cbr_forward.2} parent=5 // pred_check
      _
    $region26: #{cbr_forward.2} parent=5 // pred_check_branch
      %133 = sbr.rel (%p130) target = $region28
    $region27: #{cbr_forward.2} parent=5 // pred_region
      %s134 = ssub.s32 %s8, 1
      %s135 = sadd.s32 %s17, %s18
      %s136 = smul.u32 32, %s135
      %p137 = scmp.lt.s32.totalorder %s136, 63
      %s138 = scalar_select %p137, %s136, 63
      %s139 = smul.addr %s138, 4
      %s140 = scalar_lea.vmem %s0, %s139
      %p141 = pneg %p48
      %p142 = pneg %p45
      %p143 = pneg %p69
      %p144 = pneg %p66
      %p145 = pneg %p95
      %p146 = pneg %p92
      %p147 = scmp.lt.s32.totalorder %s17, 1
      %s148 = scalar_select %p147, %s17, 1
      %s149 = smul.addr %s148, 2
      %s150 = scalar_lea.vmem %s2, %s149
      %s151 = sadd.s32 %s17, %s18
      %s152 = smul.u32 32, %s151
      %p153 = scmp.lt.s32.totalorder %s152, 63
      %s154 = scalar_select %p153, %s152, 63
      %s155 = smul.addr %s154, 4
      %s156 = scalar_lea.vmem %s0, %s155
      %s157 = sadd.s32 %s17, %s18
      %s158 = smul.u32 32, %s157
      %p159 = scmp.lt.s32.totalorder %s17, 1
      %s160 = scalar_select %p159, %s17, 1
      %s161 = smul.addr %s160, 2
      %s162 = scalar_lea.vmem %s2, %s161
      %p164 = scmp.eq.s32.totalorder %s18, 0
      // Predicated region
      $region29: #{cbr_forward.2} parent=27 // pred_check
        %p165 = pneg %p164
      $region30: #{cbr_forward.2} parent=27 // pred_check_branch
        %167 = sbr.rel (%p165) target = $region32
      $region31: #{cbr_forward.2} parent=27 // pred_region
        %168 = vst [vmem:[%s162] sm:$0x3] 0.0
      $region32: #{cbr_forward.2} parent=27 // pred_fallthru
        _
      %v169 = vld [vmem:[%s156] sm:$0xf]
      %v170 = vld [vmem:[%s156 + $0x4] sm:$0xf]
      %v171 = vld [vmem:[%s156 + $0x8] sm:$0xf]
      %v172 = vld [vmem:[%s156 + $0xc] sm:$0xf]
      %v173 = vld [vmem:[%s156 + $0x10] sm:$0xf]
      %v174 = vld [vmem:[%s156 + $0x14] sm:$0xf]
      %v175 = vld [vmem:[%s156 + $0x18] sm:$0xf]
      %v176 = vld [vmem:[%s156 + $0x1c] sm:$0xf]
      %v177 = vld [vmem:[%s156 + $0x20] sm:$0xf]
      %v178 = vld [vmem:[%s156 + $0x24] sm:$0xf]
      %v179 = vld [vmem:[%s156 + $0x28] sm:$0xf]
      %v180 = vld [vmem:[%s156 + $0x2c] sm:$0xf]
      %v181 = vld [vmem:[%s156 + $0x30] sm:$0xf]
      %v182 = vld [vmem:[%s156 + $0x34] sm:$0xf]
      %v183 = vld [vmem:[%s156 + $0x38] sm:$0xf]
      %v184 = vld [vmem:[%s156 + $0x3c] sm:$0xf]
      %v185 = vld [vmem:[%s156 + $0x40] sm:$0xf]
      %v186 = vld [vmem:[%s156 + $0x44] sm:$0xf]
      %v187 = vld [vmem:[%s156 + $0x48] sm:$0xf]
      %v188 = vld [vmem:[%s156 + $0x4c] sm:$0xf]
      %v189 = vld [vmem:[%s156 + $0x50] sm:$0xf]
      %v190 = vld [vmem:[%s156 + $0x54] sm:$0xf]
      %v191 = vld [vmem:[%s156 + $0x58] sm:$0xf]
      %v192 = vld [vmem:[%s156 + $0x5c] sm:$0xf]
      %v193 = vld [vmem:[%s156 + $0x60] sm:$0xf]
      %v194 = vld [vmem:[%s156 + $0x64] sm:$0xf]
      %v195 = vld [vmem:[%s156 + $0x68] sm:$0xf]
      %v196 = vld [vmem:[%s156 + $0x6c] sm:$0xf]
      %v197 = vld [vmem:[%s156 + $0x70] sm:$0xf]
      %v198 = vld [vmem:[%s156 + $0x74] sm:$0xf]
      %v199 = vld [vmem:[%s156 + $0x78] sm:$0xf]
      %v200 = vld [vmem:[%s156 + $0x7c] sm:$0xf]
      %v201 = vld [vmem:[%s1] sm:$0xf]
      %v202 = vld [vmem:[%s1 + $0x4] sm:$0xf]
      %v203 = vld [vmem:[%s1 + $0x8] sm:$0xf]
      %v204 = vld [vmem:[%s1 + $0xc] sm:$0xf]
      %v205 = vld [vmem:[%s1 + $0x10] sm:$0x3]
      %v238 = vunpack.c.l.b16 %v169
      %v239 = vunpack.c.l.b16 %v170
      %v240 = vunpack.c.l.b16 %v171
      %v241 = vunpack.c.l.b16 %v172
      %v242 = vunpack.c.l.b16 %v173
      %v243 = vunpack.c.l.b16 %v174
      %v244 = vunpack.c.l.b16 %v175
      %v245 = vunpack.c.l.b16 %v176
      %v246 = vunpack.c.l.b16 %v177
      %v247 = vunpack.c.l.b16 %v178
      %v248 = vunpack.c.l.b16 %v179
      %v249 = vunpack.c.l.b16 %v180
      %v250 = vunpack.c.l.b16 %v181
      %v251 = vunpack.c.l.b16 %v182
      %v252 = vunpack.c.l.b16 %v183
      %v253 = vunpack.c.l.b16 %v184
      %v254 = vunpack.c.l.b16 %v185
      %v255 = vunpack.c.l.b16 %v186
      %v256 = vunpack.c.l.b16 %v187
      %v257 = vunpack.c.l.b16 %v188
      %v258 = vunpack.c.l.b16 %v189
      %v259 = vunpack.c.l.b16 %v190
      %v260 = vunpack.c.l.b16 %v191
      %v261 = vunpack.c.l.b16 %v192
      %v262 = vunpack.c.l.b16 %v193
      %v263 = vunpack.c.l.b16 %v194
      %v264 = vunpack.c.l.b16 %v195
      %v265 = vunpack.c.l.b16 %v196
      %v266 = vunpack.c.l.b16 %v197
      %v267 = vunpack.c.l.b16 %v198
      %v268 = vunpack.c.l.b16 %v199
      %v269 = vunpack.c.l.b16 %v200
      %v270 = vpack.c.b16 %v239, %v238
      %v271 = vpack.c.b16 %v241, %v240
      %v272 = vpack.c.b16 %v243, %v242
      %v273 = vpack.c.b16 %v245, %v244
      %v274 = vpack.c.b16 %v247, %v246
      %v275 = vpack.c.b16 %v249, %v248
      %v276 = vpack.c.b16 %v251, %v250
      %v277 = vpack.c.b16 %v253, %v252
      %v278 = vpack.c.b16 %v255, %v254
      %v279 = vpack.c.b16 %v257, %v256
      %v280 = vpack.c.b16 %v259, %v258
      %v281 = vpack.c.b16 %v261, %v260
      %v282 = vpack.c.b16 %v263, %v262
      %v283 = vpack.c.b16 %v265, %v264
      %v284 = vpack.c.b16 %v267, %v266
      %v285 = vpack.c.b16 %v269, %v268
      %v291 = vunpack.c.l.b16 %v201
      %v292 = vunpack.c.l.b16 %v202
      %v293 = vunpack.c.l.b16 %v203
      %v294 = vunpack.c.l.b16 %v204
      %v295 = vunpack.c.l.b16 %v205
      %v296 = vpack.c.b16 %v292, %v291
      %v297 = vpack.c.b16 %v294, %v293
      %v298 = vpack.c.b16 %v295, %v295
      %vm301 = vcmask 293888
      %v303 = vsel %vm301, %v270, 0
      %v306 = vsel %vm301, %v271, 0
      %v309 = vsel %vm301, %v272, 0
      %v312 = vsel %vm301, %v273, 0
      %v315 = vsel %vm301, %v274, 0
      %v318 = vsel %vm301, %v275, 0
      %v321 = vsel %vm301, %v276, 0
      %v324 = vsel %vm301, %v277, 0
      %v327 = vsel %vm301, %v278, 0
      %v330 = vsel %vm301, %v279, 0
      %v333 = vsel %vm301, %v280, 0
      %v336 = vsel %vm301, %v281, 0
      %v339 = vsel %vm301, %v282, 0
      %v342 = vsel %vm301, %v283, 0
      %v345 = vsel %vm301, %v284, 0
      %v348 = vsel %vm301, %v285, 0
      %vm350 = vcmask 1041408
      %v352 = vsel %vm350, %v298, 0
      %354 = vmatprep.subr.bf16.mxu0 0
      %355 = vmatpush1.bf16.msra.mxu0 0
      %356 = vmatprep.subr.bf16.mxu0 0
      %357 = vmatpush1.bf16.msra.mxu0 0
      %358 = vmatprep.subr.bf16.mxu0 0
      %359 = vmatpush1.bf16.msra.mxu0 0
      %360 = vmatprep.subr.bf16.mxu0 0
      %361 = vmatpush1.bf16.msra.mxu0 0
      %362 = vmatprep.subr.bf16.mxu0 0
      %363 = vmatpush1.bf16.msra.mxu0 0
      %364 = vmatprep.subr.bf16.mxu0 0
      %365 = vmatpush1.bf16.msra.mxu0 %v352
      %366 = vmatprep.subr.bf16.mxu0 0
      %367 = vmatpush1.bf16.msra.mxu0 %v297
      %368 = vmatprep.subr.bf16.mxu0 0
      %369 = vmatpush1.bf16.msra.mxu0 %v296
      %370 = vmatprep.subr.bf16.mxu0 0
      %371 = vmatpush2.bf16.msra.mxu0 0
      %372 = vmatprep.subr.bf16.mxu0 0
      %373 = vmatpush2.bf16.msra.mxu0 0
      %374 = vmatprep.subr.bf16.mxu0 0
      %375 = vmatpush2.bf16.msra.mxu0 0
      %376 = vmatprep.subr.bf16.mxu0 0
      %377 = vmatpush2.bf16.msra.mxu0 0
      %378 = vmatprep.subr.bf16.mxu0 0
      %379 = vmatpush2.bf16.msra.mxu0 0
      %380 = vmatprep.subr.bf16.mxu0 0
      %381 = vmatpush2.bf16.msra.mxu0 0
      %382 = vmatprep.subr.bf16.mxu0 0
      %383 = vmatpush2.bf16.msra.mxu0 0
      %384 = vmatprep.subr.bf16.mxu0 0
      %385 = vmatpush2.bf16.msra.mxu0 0
      %386 = vmatprep.mubr.bf16.mxu0 0
      %387 = vmatmul.mubr.bf16.gmra.mxu0 %v303
      %v388 = vpop.f32.mrf.mxu0
      %v389 = vadd.f32 0.0, %v388
      %v390 = vpop.f32.mrf.mxu0
      %v391 = vpop.f32.mrf.mxu0
      %v392 = vadd.f32 0.0, %v391
      %v393 = vpop.f32.mrf.mxu0
      %394 = vmatprep.mubr.bf16.mxu0 0
      %395 = vmatmul.mubr.bf16.gmra.mxu0 %v306
      %v396 = vpop.f32.mrf.mxu0
      %v397 = vadd.f32 0.0, %v396
      %v398 = vpop.f32.mrf.mxu0
      %v399 = vpop.f32.mrf.mxu0
      %v400 = vadd.f32 0.0, %v399
      %v401 = vpop.f32.mrf.mxu0
      %402 = vmatprep.mubr.bf16.mxu0 0
      %403 = vmatmul.mubr.bf16.gmra.mxu0 %v309
      %v404 = vpop.f32.mrf.mxu0
      %v405 = vadd.f32 0.0, %v404
      %v406 = vpop.f32.mrf.mxu0
      %v407 = vpop.f32.mrf.mxu0
      %v408 = vadd.f32 0.0, %v407
      %v409 = vpop.f32.mrf.mxu0
      %410 = vmatprep.mubr.bf16.mxu0 0
      %411 = vmatmul.mubr.bf16.gmra.mxu0 %v312
      %v412 = vpop.f32.mrf.mxu0
      %v413 = vadd.f32 0.0, %v412
      %v414 = vpop.f32.mrf.mxu0
      %v415 = vpop.f32.mrf.mxu0
      %v416 = vadd.f32 0.0, %v415
      %v417 = vpop.f32.mrf.mxu0
      %418 = vmatprep.mubr.bf16.mxu0 0
      %419 = vmatmul.mubr.bf16.gmra.mxu0 %v315
      %v420 = vpop.f32.mrf.mxu0
      %v421 = vadd.f32 0.0, %v420
      %v422 = vpop.f32.mrf.mxu0
      %v423 = vpop.f32.mrf.mxu0
      %v424 = vadd.f32 0.0, %v423
      %v425 = vpop.f32.mrf.mxu0
      %426 = vmatprep.mubr.bf16.mxu0 0
      %427 = vmatmul.mubr.bf16.gmra.mxu0 %v318
      %v428 = vpop.f32.mrf.mxu0
      %v429 = vadd.f32 0.0, %v428
      %v430 = vpop.f32.mrf.mxu0
      %v431 = vpop.f32.mrf.mxu0
      %v432 = vadd.f32 0.0, %v431
      %v433 = vpop.f32.mrf.mxu0
      %434 = vmatprep.mubr.bf16.mxu0 0
      %435 = vmatmul.mubr.bf16.gmra.mxu0 %v321
      %v436 = vpop.f32.mrf.mxu0
      %v437 = vadd.f32 0.0, %v436
      %v438 = vpop.f32.mrf.mxu0
      %v439 = vpop.f32.mrf.mxu0
      %v440 = vadd.f32 0.0, %v439
      %v441 = vpop.f32.mrf.mxu0
      %442 = vmatprep.mubr.bf16.mxu0 0
      %443 = vmatmul.mubr.bf16.gmra.mxu0 %v324
      %v444 = vpop.f32.mrf.mxu0
      %v445 = vadd.f32 0.0, %v444
      %v446 = vpop.f32.mrf.mxu0
      %v447 = vpop.f32.mrf.mxu0
      %v448 = vadd.f32 0.0, %v447
      %v449 = vpop.f32.mrf.mxu0
      %450 = vmatprep.mubr.bf16.mxu0 0
      %451 = vmatmul.mubr.bf16.gmra.mxu0 %v327
      %v452 = vpop.f32.mrf.mxu0
      %v453 = vadd.f32 0.0, %v452
      %v454 = vpop.f32.mrf.mxu0
      %v455 = vpop.f32.mrf.mxu0
      %v456 = vadd.f32 0.0, %v455
      %v457 = vpop.f32.mrf.mxu0
      %458 = vmatprep.mubr.bf16.mxu0 0
      %459 = vmatmul.mubr.bf16.gmra.mxu0 %v330
      %v460 = vpop.f32.mrf.mxu0
      %v461 = vadd.f32 0.0, %v460
      %v462 = vpop.f32.mrf.mxu0
      %v463 = vpop.f32.mrf.mxu0
      %v464 = vadd.f32 0.0, %v463
      %v465 = vpop.f32.mrf.mxu0
      %466 = vmatprep.mubr.bf16.mxu0 0
      %467 = vmatmul.mubr.bf16.gmra.mxu0 %v333
      %v468 = vpop.f32.mrf.mxu0
      %v469 = vadd.f32 0.0, %v468
      %v470 = vpop.f32.mrf.mxu0
      %v471 = vpop.f32.mrf.mxu0
      %v472 = vadd.f32 0.0, %v471
      %v473 = vpop.f32.mrf.mxu0
      %474 = vmatprep.mubr.bf16.mxu0 0
      %475 = vmatmul.mubr.bf16.gmra.mxu0 %v336
      %v476 = vpop.f32.mrf.mxu0
      %v477 = vadd.f32 0.0, %v476
      %v478 = vpop.f32.mrf.mxu0
      %v479 = vpop.f32.mrf.mxu0
      %v480 = vadd.f32 0.0, %v479
      %v481 = vpop.f32.mrf.mxu0
      %482 = vmatprep.mubr.bf16.mxu0 0
      %483 = vmatmul.mubr.bf16.gmra.mxu0 %v339
      %v484 = vpop.f32.mrf.mxu0
      %v485 = vadd.f32 0.0, %v484
      %v486 = vpop.f32.mrf.mxu0
      %v487 = vpop.f32.mrf.mxu0
      %v488 = vadd.f32 0.0, %v487
      %v489 = vpop.f32.mrf.mxu0
      %490 = vmatprep.mubr.bf16.mxu0 0
      %491 = vmatmul.mubr.bf16.gmra.mxu0 %v342
      %v492 = vpop.f32.mrf.mxu0
      %v493 = vadd.f32 0.0, %v492
      %v494 = vpop.f32.mrf.mxu0
      %v495 = vpop.f32.mrf.mxu0
      %v496 = vadd.f32 0.0, %v495
      %v497 = vpop.f32.mrf.mxu0
      %498 = vmatprep.mubr.bf16.mxu0 0
      %499 = vmatmul.mubr.bf16.gmra.mxu0 %v345
      %v500 = vpop.f32.mrf.mxu0
      %v501 = vadd.f32 0.0, %v500
      %v502 = vpop.f32.mrf.mxu0
      %v503 = vpop.f32.mrf.mxu0
      %v504 = vadd.f32 0.0, %v503
      %v505 = vpop.f32.mrf.mxu0
      %506 = vmatprep.mubr.bf16.mxu0 0
      %507 = vmatmul.mubr.bf16.gmra.mxu0 %v348
      %v508 = vpop.f32.mrf.mxu0
      %v509 = vadd.f32 0.0, %v508
      %v510 = vpop.f32.mrf.mxu0
      %v511 = vpop.f32.mrf.mxu0
      %v512 = vadd.f32 0.0, %v511
      %v513 = vpop.f32.mrf.mxu0
      %514 = vdwg.mxu0
      %v515 = vadd.f32 %v389, %v392
      %v516 = vadd.f32 %v515, %v397
      %v517 = vadd.f32 %v516, %v400
      %v518 = vadd.f32 %v517, %v405
      %v519 = vadd.f32 %v518, %v408
      %v520 = vadd.f32 %v519, %v413
      %v521 = vadd.f32 %v520, %v416
      %v522 = vadd.f32 %v521, %v421
      %v523 = vadd.f32 %v522, %v424
      %v524 = vadd.f32 %v523, %v429
      %v525 = vadd.f32 %v524, %v432
      %v526 = vadd.f32 %v525, %v437
      %v527 = vadd.f32 %v526, %v440
      %v528 = vadd.f32 %v527, %v445
      %v529 = vadd.f32 %v528, %v448
      %v530 = vadd.f32 %v529, %v453
      %v531 = vadd.f32 %v530, %v456
      %v532 = vadd.f32 %v531, %v461
      %v533 = vadd.f32 %v532, %v464
      %v534 = vadd.f32 %v533, %v469
      %v535 = vadd.f32 %v534, %v472
      %v536 = vadd.f32 %v535, %v477
      %v537 = vadd.f32 %v536, %v480
      %v538 = vadd.f32 %v537, %v485
      %v539 = vadd.f32 %v538, %v488
      %v540 = vadd.f32 %v539, %v493
      %v541 = vadd.f32 %v540, %v496
      %v542 = vadd.f32 %v541, %v501
      %v543 = vadd.f32 %v542, %v504
      %v544 = vadd.f32 %v543, %v509
      %v545 = vadd.f32 %v544, %v512
      %v546 = vrot.slane %v545, 4
      %v547 = vadd.f32 %v545, %v546
      %v548 = vrot.slane %v547, 2
      %v549 = vadd.f32 %v547, %v548
      %v550 = vrot.slane %v549, 1
      %v551 = vadd.f32 %v549, %v550
      %v552 = vmul.f32 %v389, %v389
      %v553 = vmul.f32 %v392, %v392
      %v554 = vmul.f32 %v397, %v397
      %v555 = vmul.f32 %v400, %v400
      %v556 = vmul.f32 %v405, %v405
      %v557 = vmul.f32 %v408, %v408
      %v558 = vmul.f32 %v413, %v413
      %v559 = vmul.f32 %v416, %v416
      %v560 = vmul.f32 %v421, %v421
      %v561 = vmul.f32 %v424, %v424
      %v562 = vmul.f32 %v429, %v429
      %v563 = vmul.f32 %v432, %v432
      %v564 = vmul.f32 %v437, %v437
      %v565 = vmul.f32 %v440, %v440
      %v566 = vmul.f32 %v445, %v445
      %v567 = vmul.f32 %v448, %v448
      %v568 = vmul.f32 %v453, %v453
      %v569 = vmul.f32 %v456, %v456
      %v570 = vmul.f32 %v461, %v461
      %v571 = vmul.f32 %v464, %v464
      %v572 = vmul.f32 %v469, %v469
      %v573 = vmul.f32 %v472, %v472
      %v574 = vmul.f32 %v477, %v477
      %v575 = vmul.f32 %v480, %v480
      %v576 = vmul.f32 %v485, %v485
      %v577 = vmul.f32 %v488, %v488
      %v578 = vmul.f32 %v493, %v493
      %v579 = vmul.f32 %v496, %v496
      %v580 = vmul.f32 %v501, %v501
      %v581 = vmul.f32 %v504, %v504
      %v582 = vmul.f32 %v509, %v509
      %v583 = vmul.f32 %v512, %v512
      %v584 = vadd.f32 %v552, %v553
      %v585 = vadd.f32 %v584, %v554
      %v586 = vadd.f32 %v585, %v555
      %v587 = vadd.f32 %v586, %v556
      %v588 = vadd.f32 %v587, %v557
      %v589 = vadd.f32 %v588, %v558
      %v590 = vadd.f32 %v589, %v559
      %v591 = vadd.f32 %v590, %v560
      %v592 = vadd.f32 %v591, %v561
      %v593 = vadd.f32 %v592, %v562
      %v594 = vadd.f32 %v593, %v563
      %v595 = vadd.f32 %v594, %v564
      %v596 = vadd.f32 %v595, %v565
      %v597 = vadd.f32 %v596, %v566
      %v598 = vadd.f32 %v597, %v567
      %v599 = vadd.f32 %v598, %v568
      %v600 = vadd.f32 %v599, %v569
      %v601 = vadd.f32 %v600, %v570
      %v602 = vadd.f32 %v601, %v571
      %v603 = vadd.f32 %v602, %v572
      %v604 = vadd.f32 %v603, %v573
      %v605 = vadd.f32 %v604, %v574
      %v606 = vadd.f32 %v605, %v575
      %v607 = vadd.f32 %v606, %v576
      %v608 = vadd.f32 %v607, %v577
      %v609 = vadd.f32 %v608, %v578
      %v610 = vadd.f32 %v609, %v579
      %v611 = vadd.f32 %v610, %v580
      %v612 = vadd.f32 %v611, %v581
      %v613 = vadd.f32 %v612, %v582
      %v614 = vadd.f32 %v613, %v583
      %v615 = vrot.slane %v614, 4
      %v616 = vadd.f32 %v614, %v615
      %v617 = vrot.slane %v616, 2
      %v618 = vadd.f32 %v616, %v617
      %v619 = vrot.slane %v618, 1
      %v620 = vadd.f32 %v618, %v619
      %v621 = vld [vmem:[%s162] sm:$0x3]
      %vm622 = vcmask 1040384
      %v623 = vsel %vm622, %v551, %v620
      %v624 = vadd.f32 %v621, %v623
      %625 = vst [vmem:[%s162] sm:$0x3] %v624
      %p626 = scmp.lt.s32.totalorder %s17, 1
      %s627 = scalar_select %p626, %s17, 1
      %s628 = smul.addr %s627, 2
      %s629 = scalar_lea.vmem %s2, %s628
      // Predicated region
      $region33: #{cbr_forward.2} parent=27 // pred_check
        %p630 = pneg %p92
      $region34: #{cbr_forward.2} parent=27 // pred_check_branch
        %632 = sbr.rel (%p630) target = $region36
      $region35: #{cbr_forward.2} parent=27 // pred_region
        _
      $region36: #{cbr_forward.2} parent=27 // pred_fallthru
        _
    $region28: #{cbr_forward.2} parent=5 // pred_fallthru
      _
    %p633 = scmp.le.s32.totalorder 2, %s8
    // Predicated region
    $region37: #{cbr_forward.2} parent=5 // pred_check
      %p634 = pneg %p633
    $region38: #{cbr_forward.2} parent=5 // pred_check_branch
      %636 = sbr.rel (%p634) target = $region40
    $region39: #{cbr_forward.2} parent=5 // pred_region
      %s637 = ssub.s32 %s8, 2
      // Predicated region
      $region41: #{cbr_forward.2} parent=39 // pred_check
        %p638 = pneg %p98
      $region42: #{cbr_forward.2} parent=39 // pred_check_branch
        %640 = sbr.rel (%p638) target = $region44
      $region43: #{cbr_forward.2} parent=39 // pred_region
        %p641 = scmp.lt.s32.totalorder %s19, 1
        %s642 = scalar_select %p641, %s19, 1
        %s643 = smul.addr %s642, 2
        %s644 = scalar_lea.vmem %s2, %s643
      $region44: #{cbr_forward.2} parent=39 // pred_fallthru
        _
    $region40: #{cbr_forward.2} parent=5 // pred_fallthru
      _
  $region6: #{cbr_forward.2} parent=0 // loop_footer
    %s12 = sadd.s32 1, %s8
  $region7: #{cbr_forward.2} parent=0 // loop_footer_branch
    %7 = sbr.rel target = $region3
  $region8: #{cbr_forward.2} parent=0 // loop_exit
    _

// kernel: cbr_forward.3
$region0: #{cbr_forward.3}
  #allocation0 [shape = 'u32[]', space=smem, size = 0x4, offset = 0x4, fixed_abs, tag = 'smem constant byte address 0x4 - core index']
  #allocation1 [shape = 'u32[144,128]{1,0:T(1,128)}', space=vmem, size = 0x12000, scoped, tag = 'internal scratch']
  #allocation2 [shape = 'f32[1]{0:T(128)S(6)}', space=smem, size = 0x200, scoped, tag = 'scoped memory for cbr_forward.3']
  %s0 = inlined_call_operand.<no memory space> [shape: f32[1], index: 0, kind: input, shape index: {}]
  %s1 = inlined_call_operand.vmem [shape: bf16[512,36], index: 1, kind: input, shape index: {}]
  %s2 = inlined_call_operand.vmem [shape: bf16[36,128], index: 2, kind: input, shape index: {}]
  %s3 = inlined_call_operand.vmem [shape: f32[1,128], index: 3, kind: input, shape index: {}]
  %s4 = inlined_call_operand.vmem [shape: f32[1,128], index: 4, kind: input, shape index: {}]
  %s5 = inlined_call_operand.vmem [shape: bf16[512,128], index: 5, kind: output, shape index: {}]
  %s6 = sld [smem:[#allocation0]]
  $region53: #{cbr_forward.3} parent=0
    _
  %s8 = ssub.s32 1, %s6
  %s9 = scalar_select 0, %s8, %s6
  %10 = sst [smem:[#allocation2]] %s0
  loop: start=0, step=1, limit=4
  $region2: #{cbr_forward.3} parent=0 // loop_pre_header
    _
  $region3: #{cbr_forward.3} parent=0 // loop_header
    %s12 = sphi 0, %s16
    %p13 = scmp.ge.s32.totalorder %s12, 4
    %s20 = sphi 0, %s20
    %s22 = sphi 0, %s20
    %s23 = sphi 0, %s22
    %s37 = sphi 0, %s23
    %s43 = sphi 0, %s45
    %s46 = sphi 0, %s43
    %s47 = sphi 0, %s46
    %s63 = sphi 0, %s47
    %s67 = sphi 0, %s67
    %s69 = sphi 0, %s67
    %s70 = sphi 0, %s69
    %s84 = sphi 0, %s70
    %s88 = sphi 0, %s88
    %s90 = sphi 0, %s88
    %s91 = sphi 0, %s90
    %s105 = sphi 0, %s91
    %s109 = sphi 0, %s109
    %s111 = sphi 0, %s109
    %s112 = sphi 0, %s111
    %s126 = sphi 0, %s112
    %s132 = sphi 0, %s134
    %s135 = sphi 0, %s132
    %s136 = sphi 0, %s135
    %s152 = sphi 0, %s136
  $region4: #{cbr_forward.3} parent=0 // loop_header_branch
    %15 = sbr.rel (%p13) target = $region8
  $region5: #{cbr_forward.3} parent=0 // loop_body
    %s17 = ssub.s32 %s12, 1
    %s18 = ssub.s32 %s12, 2
    %s19 = sadd.s32 %s12, 1
    %s21 = sadd.s32 %s20, 1
    %p24 = scmp.eq.s32.totalorder %s12, 1
    %p25 = scmp.ne.s32.totalorder %s20, %s22
    %p26 = scmp.eq.s32.totalorder %s12, 0
    %p27 = por %p25, %p26
    %p28 = scmp.ne.s32.totalorder %s20, %s22
    %p29 = scmp.eq.s32.totalorder %s17, 1
    %p30 = por %p28, %p29
    %p31 = scmp.ne.s32.totalorder %s22, %s23
    %p32 = scmp.eq.s32.totalorder %s17, 0
    %p33 = por %p31, %p32
    %p34 = scmp.ne.s32.totalorder %s22, %s23
    %p35 = scmp.eq.s32.totalorder %s18, 1
    %p36 = por %p34, %p35
    %p38 = scmp.ne.s32.totalorder %s23, %s37
    %p39 = scmp.eq.s32.totalorder %s18, 0
    %p40 = por %p38, %p39
    %s41 = ssub.s32 %s12, %s19
    %p42 = scmp.eq.s32.totalorder %s41, 0
    %s44 = sadd.s32 %s43, 1
    %s45 = scalar_select %p42, %s43, %s44
    %p48 = pneg %p42
    %p49 = scmp.eq.s32.totalorder %s12, 1
    %p50 = por %p48, %p49
    %p51 = scmp.ne.s32.totalorder %s43, %s46
    %p52 = scmp.eq.s32.totalorder %s12, 0
    %p53 = por %p51, %p52
    %p54 = scmp.ne.s32.totalorder %s43, %s46
    %p55 = scmp.eq.s32.totalorder %s17, 1
    %p56 = por %p54, %p55
    %p57 = scmp.ne.s32.totalorder %s46, %s47
    %p58 = scmp.eq.s32.totalorder %s17, 0
    %p59 = por %p57, %p58
    %p60 = scmp.ne.s32.totalorder %s46, %s47
    %p61 = scmp.eq.s32.totalorder %s18, 1
    %p62 = por %p60, %p61
    %p64 = scmp.ne.s32.totalorder %s47, %s63
    %p65 = scmp.eq.s32.totalorder %s18, 0
    %p66 = por %p64, %p65
    %s68 = sadd.s32 %s67, 1
    %p71 = scmp.eq.s32.totalorder %s12, 1
    %p72 = scmp.ne.s32.totalorder %s67, %s69
    %p73 = scmp.eq.s32.totalorder %s12, 0
    %p74 = por %p72, %p73
    %p75 = scmp.ne.s32.totalorder %s67, %s69
    %p76 = scmp.eq.s32.totalorder %s17, 1
    %p77 = por %p75, %p76
    %p78 = scmp.ne.s32.totalorder %s69, %s70
    %p79 = scmp.eq.s32.totalorder %s17, 0
    %p80 = por %p78, %p79
    %p81 = scmp.ne.s32.totalorder %s69, %s70
    %p82 = scmp.eq.s32.totalorder %s18, 1
    %p83 = por %p81, %p82
    %p85 = scmp.ne.s32.totalorder %s70, %s84
    %p86 = scmp.eq.s32.totalorder %s18, 0
    %p87 = por %p85, %p86
    %s89 = sadd.s32 %s88, 1
    %p92 = scmp.eq.s32.totalorder %s12, 1
    %p93 = scmp.ne.s32.totalorder %s88, %s90
    %p94 = scmp.eq.s32.totalorder %s12, 0
    %p95 = por %p93, %p94
    %p96 = scmp.ne.s32.totalorder %s88, %s90
    %p97 = scmp.eq.s32.totalorder %s17, 1
    %p98 = por %p96, %p97
    %p99 = scmp.ne.s32.totalorder %s90, %s91
    %p100 = scmp.eq.s32.totalorder %s17, 0
    %p101 = por %p99, %p100
    %p102 = scmp.ne.s32.totalorder %s90, %s91
    %p103 = scmp.eq.s32.totalorder %s18, 1
    %p104 = por %p102, %p103
    %p106 = scmp.ne.s32.totalorder %s91, %s105
    %p107 = scmp.eq.s32.totalorder %s18, 0
    %p108 = por %p106, %p107
    %s110 = sadd.s32 %s109, 1
    %p113 = scmp.eq.s32.totalorder %s12, 1
    %p114 = scmp.ne.s32.totalorder %s109, %s111
    %p115 = scmp.eq.s32.totalorder %s12, 0
    %p116 = por %p114, %p115
    %p117 = scmp.ne.s32.totalorder %s109, %s111
    %p118 = scmp.eq.s32.totalorder %s17, 1
    %p119 = por %p117, %p118
    %p120 = scmp.ne.s32.totalorder %s111, %s112
    %p121 = scmp.eq.s32.totalorder %s17, 0
    %p122 = por %p120, %p121
    %p123 = scmp.ne.s32.totalorder %s111, %s112
    %p124 = scmp.eq.s32.totalorder %s18, 1
    %p125 = por %p123, %p124
    %p127 = scmp.ne.s32.totalorder %s112, %s126
    %p128 = scmp.eq.s32.totalorder %s18, 0
    %p129 = por %p127, %p128
    %s130 = ssub.s32 %s12, %s19
    %p131 = scmp.eq.s32.totalorder %s130, 0
    %s133 = sadd.s32 %s132, 1
    %s134 = scalar_select %p131, %s132, %s133
    %p137 = pneg %p131
    %p138 = scmp.eq.s32.totalorder %s12, 1
    %p139 = por %p137, %p138
    %p140 = scmp.ne.s32.totalorder %s132, %s135
    %p141 = scmp.eq.s32.totalorder %s12, 0
    %p142 = por %p140, %p141
    %p143 = scmp.ne.s32.totalorder %s132, %s135
    %p144 = scmp.eq.s32.totalorder %s17, 1
    %p145 = por %p143, %p144
    %p146 = scmp.ne.s32.totalorder %s135, %s136
    %p147 = scmp.eq.s32.totalorder %s17, 0
    %p148 = por %p146, %p147
    %p149 = scmp.ne.s32.totalorder %s135, %s136
    %p150 = scmp.eq.s32.totalorder %s18, 1
    %p151 = por %p149, %p150
    %p153 = scmp.ne.s32.totalorder %s136, %s152
    %p154 = scmp.eq.s32.totalorder %s18, 0
    %p155 = por %p153, %p154
    %p156 = scmp.le.s32.totalorder 1, %s12
    %p157 = scmp.lt.s32.totalorder %s12, 3
    %p158 = pnand %p156, %p157
    %p159 = pneg %p158
    // Predicated region
    $region9: #{cbr_forward.3} parent=5 // pred_check
      _
    $region10: #{cbr_forward.3} parent=5 // pred_check_branch
      %161 = sbr.rel (%p158) target = $region12
    $region11: #{cbr_forward.3} parent=5 // pred_region
      %s162 = ssub.s32 %s12, 1
      // Predicated region
      $region13: #{cbr_forward.3} parent=11 // pred_check
        %p163 = pneg %p33
      $region14: #{cbr_forward.3} parent=11 // pred_check_branch
        %165 = sbr.rel (%p163) target = $region16
      $region15: #{cbr_forward.3} parent=11 // pred_region
        _
      $region16: #{cbr_forward.3} parent=11 // pred_fallthru
        _
      // Predicated region
      $region17: #{cbr_forward.3} parent=11 // pred_check
        %p166 = pneg %p80
      $region18: #{cbr_forward.3} parent=11 // pred_check_branch
        %168 = sbr.rel (%p166) target = $region20
      $region19: #{cbr_forward.3} parent=11 // pred_region
        _
      $region20: #{cbr_forward.3} parent=11 // pred_fallthru
        _
      // Predicated region
      $region21: #{cbr_forward.3} parent=11 // pred_check
        %p169 = pneg %p101
      $region22: #{cbr_forward.3} parent=11 // pred_check_branch
        %171 = sbr.rel (%p169) target = $region24
      $region23: #{cbr_forward.3} parent=11 // pred_region
        _
      $region24: #{cbr_forward.3} parent=11 // pred_fallthru
        _
      // Predicated region
      $region25: #{cbr_forward.3} parent=11 // pred_check
        %p172 = pneg %p122
      $region26: #{cbr_forward.3} parent=11 // pred_check_branch
        %174 = sbr.rel (%p172) target = $region28
      $region27: #{cbr_forward.3} parent=11 // pred_region
        _
      $region28: #{cbr_forward.3} parent=11 // pred_fallthru
        _
    $region12: #{cbr_forward.3} parent=5 // pred_fallthru
      _
    %p175 = scmp.lt.s32.totalorder %s12, 2
    // Predicated region
    $region29: #{cbr_forward.3} parent=5 // pred_check
      %p176 = pneg %p175
    $region30: #{cbr_forward.3} parent=5 // pred_check_branch
      %178 = sbr.rel (%p176) target = $region32
    $region31: #{cbr_forward.3} parent=5 // pred_region
      // Predicated region
      $region33: #{cbr_forward.3} parent=31 // pred_check
        %p179 = pneg %p53
      $region34: #{cbr_forward.3} parent=31 // pred_check_branch
        %181 = sbr.rel (%p179) target = $region36
      $region35: #{cbr_forward.3} parent=31 // pred_region
        %s182 = smul.u32 32, %s12
        %p183 = scmp.lt.s32.totalorder %s182, 63
        %s184 = scalar_select %p183, %s182, 63
        %s185 = smul.addr %s184, 4
        %s186 = scalar_lea.vmem %s1, %s185
        %s187 = smul.u32 32, %s12
      $region36: #{cbr_forward.3} parent=31 // pred_fallthru
        _
    $region32: #{cbr_forward.3} parent=5 // pred_fallthru
      _
    %p188 = scmp.le.s32.totalorder 1, %s12
    %p189 = scmp.lt.s32.totalorder %s12, 3
    %p190 = pnand %p188, %p189
    %p191 = pneg %p190
    // Predicated region
    $region37: #{cbr_forward.3} parent=5 // pred_check
      _
    $region38: #{cbr_forward.3} parent=5 // pred_check_branch
      %193 = sbr.rel (%p190) target = $region40
    $region39: #{cbr_forward.3} parent=5 // pred_region
      %s194 = ssub.s32 %s12, 1
      %p195 = pneg %p33
      %p196 = pneg %p30
      %s197 = smul.u32 32, %s17
      %p198 = scmp.lt.s32.totalorder %s197, 63
      %s199 = scalar_select %p198, %s197, 63
      %s200 = smul.addr %s199, 4
      %s201 = scalar_lea.vmem %s1, %s200
      %p202 = pneg %p59
      %p203 = pneg %p56
      %p204 = pneg %p80
      %p205 = pneg %p77
      %p206 = pneg %p101
      %p207 = pneg %p98
      %p208 = pneg %p122
      %p209 = pneg %p119
      %p210 = pneg %p148
      %p211 = pneg %p145
      %s212 = smul.u32 32, %s17
      %p213 = scmp.lt.s32.totalorder %s212, 63
      %s214 = scalar_select %p213, %s212, 63
      %s215 = smul.addr %s214, 4
      %s216 = scalar_lea.vmem %s5, %s215
      %s217 = smul.u32 32, %s17
      %p218 = scmp.lt.s32.totalorder %s217, 63
      %s219 = scalar_select %p218, %s217, 63
      %s220 = smul.addr %s219, 4
      %s221 = scalar_lea.vmem %s1, %s220
      %s222 = smul.u32 32, %s17
      %s223 = smul.u32 32, %s17
      %p224 = scmp.lt.s32.totalorder %s223, 63
      %s225 = scalar_select %p224, %s223, 63
      %s226 = smul.addr %s225, 4
      %s227 = scalar_lea.vmem %s5, %s226
      %s228 = smul.u32 32, %s17
      %v230 = vld [vmem:[%s221] sm:$0xf]
      %v231 = vld [vmem:[%s221 + $0x4] sm:$0xf]
      %v232 = vld [vmem:[%s221 + $0x8] sm:$0xf]
      %v233 = vld [vmem:[%s221 + $0xc] sm:$0xf]
      %v234 = vld [vmem:[%s221 + $0x10] sm:$0xf]
      %v235 = vld [vmem:[%s221 + $0x14] sm:$0xf]
      %v236 = vld [vmem:[%s221 + $0x18] sm:$0xf]
      %v237 = vld [vmem:[%s221 + $0x1c] sm:$0xf]
      %v238 = vld [vmem:[%s221 + $0x20] sm:$0xf]
      %v239 = vld [vmem:[%s221 + $0x24] sm:$0xf]
      %v240 = vld [vmem:[%s221 + $0x28] sm:$0xf]
      %v241 = vld [vmem:[%s221 + $0x2c] sm:$0xf]
      %v242 = vld [vmem:[%s221 + $0x30] sm:$0xf]
      %v243 = vld [vmem:[%s221 + $0x34] sm:$0xf]
      %v244 = vld [vmem:[%s221 + $0x38] sm:$0xf]
      %v245 = vld [vmem:[%s221 + $0x3c] sm:$0xf]
      %v246 = vld [vmem:[%s221 + $0x40] sm:$0xf]
      %v247 = vld [vmem:[%s221 + $0x44] sm:$0xf]
      %v248 = vld [vmem:[%s221 + $0x48] sm:$0xf]
      %v249 = vld [vmem:[%s221 + $0x4c] sm:$0xf]
      %v250 = vld [vmem:[%s221 + $0x50] sm:$0xf]
      %v251 = vld [vmem:[%s221 + $0x54] sm:$0xf]
      %v252 = vld [vmem:[%s221 + $0x58] sm:$0xf]
      %v253 = vld [vmem:[%s221 + $0x5c] sm:$0xf]
      %v254 = vld [vmem:[%s221 + $0x60] sm:$0xf]
      %v255 = vld [vmem:[%s221 + $0x64] sm:$0xf]
      %v256 = vld [vmem:[%s221 + $0x68] sm:$0xf]
      %v257 = vld [vmem:[%s221 + $0x6c] sm:$0xf]
      %v258 = vld [vmem:[%s221 + $0x70] sm:$0xf]
      %v259 = vld [vmem:[%s221 + $0x74] sm:$0xf]
      %v260 = vld [vmem:[%s221 + $0x78] sm:$0xf]
      %v261 = vld [vmem:[%s221 + $0x7c] sm:$0xf]
      %v262 = vld [vmem:[%s2] sm:$0xf]
      %v263 = vld [vmem:[%s2 + $0x4] sm:$0xf]
      %v264 = vld [vmem:[%s2 + $0x8] sm:$0xf]
      %v265 = vld [vmem:[%s2 + $0xc] sm:$0xf]
      %v266 = vld [vmem:[%s2 + $0x10] sm:$0x3]
      %v299 = vunpack.c.l.b16 %v230
      %v300 = vunpack.c.l.b16 %v231
      %v301 = vunpack.c.l.b16 %v232
      %v302 = vunpack.c.l.b16 %v233
      %v303 = vunpack.c.l.b16 %v234
      %v304 = vunpack.c.l.b16 %v235
      %v305 = vunpack.c.l.b16 %v236
      %v306 = vunpack.c.l.b16 %v237
      %v307 = vunpack.c.l.b16 %v238
      %v308 = vunpack.c.l.b16 %v239
      %v309 = vunpack.c.l.b16 %v240
      %v310 = vunpack.c.l.b16 %v241
      %v311 = vunpack.c.l.b16 %v242
      %v312 = vunpack.c.l.b16 %v243
      %v313 = vunpack.c.l.b16 %v244
      %v314 = vunpack.c.l.b16 %v245
      %v315 = vunpack.c.l.b16 %v246
      %v316 = vunpack.c.l.b16 %v247
      %v317 = vunpack.c.l.b16 %v248
      %v318 = vunpack.c.l.b16 %v249
      %v319 = vunpack.c.l.b16 %v250
      %v320 = vunpack.c.l.b16 %v251
      %v321 = vunpack.c.l.b16 %v252
      %v322 = vunpack.c.l.b16 %v253
      %v323 = vunpack.c.l.b16 %v254
      %v324 = vunpack.c.l.b16 %v255
      %v325 = vunpack.c.l.b16 %v256
      %v326 = vunpack.c.l.b16 %v257
      %v327 = vunpack.c.l.b16 %v258
      %v328 = vunpack.c.l.b16 %v259
      %v329 = vunpack.c.l.b16 %v260
      %v330 = vunpack.c.l.b16 %v261
      %v331 = vpack.c.b16 %v300, %v299
      %v332 = vpack.c.b16 %v302, %v301
      %v333 = vpack.c.b16 %v304, %v303
      %v334 = vpack.c.b16 %v306, %v305
      %v335 = vpack.c.b16 %v308, %v307
      %v336 = vpack.c.b16 %v310, %v309
      %v337 = vpack.c.b16 %v312, %v311
      %v338 = vpack.c.b16 %v314, %v313
      %v339 = vpack.c.b16 %v316, %v315
      %v340 = vpack.c.b16 %v318, %v317
      %v341 = vpack.c.b16 %v320, %v319
      %v342 = vpack.c.b16 %v322, %v321
      %v343 = vpack.c.b16 %v324, %v323
      %v344 = vpack.c.b16 %v326, %v325
      %v345 = vpack.c.b16 %v328, %v327
      %v346 = vpack.c.b16 %v330, %v329
      %v352 = vunpack.c.l.b16 %v262
      %v353 = vunpack.c.l.b16 %v263
      %v354 = vunpack.c.l.b16 %v264
      %v355 = vunpack.c.l.b16 %v265
      %v356 = vunpack.c.l.b16 %v266
      %v357 = vpack.c.b16 %v353, %v352
      %v358 = vpack.c.b16 %v355, %v354
      %v359 = vpack.c.b16 %v356, %v356
      %vm362 = vcmask 293888
      %v364 = vsel %vm362, %v331, 0
      %v367 = vsel %vm362, %v332, 0
      %v370 = vsel %vm362, %v333, 0
      %v373 = vsel %vm362, %v334, 0
      %v376 = vsel %vm362, %v335, 0
      %v379 = vsel %vm362, %v336, 0
      %v382 = vsel %vm362, %v337, 0
      %v385 = vsel %vm362, %v338, 0
      %v388 = vsel %vm362, %v339, 0
      %v391 = vsel %vm362, %v340, 0
      %v394 = vsel %vm362, %v341, 0
      %v397 = vsel %vm362, %v342, 0
      %v400 = vsel %vm362, %v343, 0
      %v403 = vsel %vm362, %v344, 0
      %v406 = vsel %vm362, %v345, 0
      %v409 = vsel %vm362, %v346, 0
      %vm411 = vcmask 1041408
      %v413 = vsel %vm411, %v359, 0
      %415 = vmatprep.subr.bf16.mxu0 0
      %416 = vmatpush1.bf16.msra.mxu0 0
      %417 = vmatprep.subr.bf16.mxu0 0
      %418 = vmatpush1.bf16.msra.mxu0 0
      %419 = vmatprep.subr.bf16.mxu0 0
      %420 = vmatpush1.bf16.msra.mxu0 0
      %421 = vmatprep.subr.bf16.mxu0 0
      %422 = vmatpush1.bf16.msra.mxu0 0
      %423 = vmatprep.subr.bf16.mxu0 0
      %424 = vmatpush1.bf16.msra.mxu0 0
      %425 = vmatprep.subr.bf16.mxu0 0
      %426 = vmatpush1.bf16.msra.mxu0 %v413
      %427 = vmatprep.subr.bf16.mxu0 0
      %428 = vmatpush1.bf16.msra.mxu0 %v358
      %429 = vmatprep.subr.bf16.mxu0 0
      %430 = vmatpush1.bf16.msra.mxu0 %v357
      %431 = vmatprep.subr.bf16.mxu0 0
      %432 = vmatpush2.bf16.msra.mxu0 0
      %433 = vmatprep.subr.bf16.mxu0 0
      %434 = vmatpush2.bf16.msra.mxu0 0
      %435 = vmatprep.subr.bf16.mxu0 0
      %436 = vmatpush2.bf16.msra.mxu0 0
      %437 = vmatprep.subr.bf16.mxu0 0
      %438 = vmatpush2.bf16.msra.mxu0 0
      %439 = vmatprep.subr.bf16.mxu0 0
      %440 = vmatpush2.bf16.msra.mxu0 0
      %441 = vmatprep.subr.bf16.mxu0 0
      %442 = vmatpush2.bf16.msra.mxu0 0
      %443 = vmatprep.subr.bf16.mxu0 0
      %444 = vmatpush2.bf16.msra.mxu0 0
      %445 = vmatprep.subr.bf16.mxu0 0
      %446 = vmatpush2.bf16.msra.mxu0 0
      %447 = vmatprep.mubr.bf16.mxu0 0
      %448 = vmatmul.mubr.bf16.gmra.mxu0 %v364
      %v449 = vpop.f32.mrf.mxu0
      %v450 = vadd.f32 0.0, %v449
      %v451 = vpop.f32.mrf.mxu0
      %v452 = vpop.f32.mrf.mxu0
      %v453 = vadd.f32 0.0, %v452
      %v454 = vpop.f32.mrf.mxu0
      %455 = vmatprep.mubr.bf16.mxu0 0
      %456 = vmatmul.mubr.bf16.gmra.mxu0 %v367
      %v457 = vpop.f32.mrf.mxu0
      %v458 = vadd.f32 0.0, %v457
      %v459 = vpop.f32.mrf.mxu0
      %v460 = vpop.f32.mrf.mxu0
      %v461 = vadd.f32 0.0, %v460
      %v462 = vpop.f32.mrf.mxu0
      %463 = vmatprep.mubr.bf16.mxu0 0
      %464 = vmatmul.mubr.bf16.gmra.mxu0 %v370
      %v465 = vpop.f32.mrf.mxu0
      %v466 = vadd.f32 0.0, %v465
      %v467 = vpop.f32.mrf.mxu0
      %v468 = vpop.f32.mrf.mxu0
      %v469 = vadd.f32 0.0, %v468
      %v470 = vpop.f32.mrf.mxu0
      %471 = vmatprep.mubr.bf16.mxu0 0
      %472 = vmatmul.mubr.bf16.gmra.mxu0 %v373
      %v473 = vpop.f32.mrf.mxu0
      %v474 = vadd.f32 0.0, %v473
      %v475 = vpop.f32.mrf.mxu0
      %v476 = vpop.f32.mrf.mxu0
      %v477 = vadd.f32 0.0, %v476
      %v478 = vpop.f32.mrf.mxu0
      %479 = vmatprep.mubr.bf16.mxu0 0
      %480 = vmatmul.mubr.bf16.gmra.mxu0 %v376
      %v481 = vpop.f32.mrf.mxu0
      %v482 = vadd.f32 0.0, %v481
      %v483 = vpop.f32.mrf.mxu0
      %v484 = vpop.f32.mrf.mxu0
      %v485 = vadd.f32 0.0, %v484
      %v486 = vpop.f32.mrf.mxu0
      %487 = vmatprep.mubr.bf16.mxu0 0
      %488 = vmatmul.mubr.bf16.gmra.mxu0 %v379
      %v489 = vpop.f32.mrf.mxu0
      %v490 = vadd.f32 0.0, %v489
      %v491 = vpop.f32.mrf.mxu0
      %v492 = vpop.f32.mrf.mxu0
      %v493 = vadd.f32 0.0, %v492
      %v494 = vpop.f32.mrf.mxu0
      %495 = vmatprep.mubr.bf16.mxu0 0
      %496 = vmatmul.mubr.bf16.gmra.mxu0 %v382
      %v497 = vpop.f32.mrf.mxu0
      %v498 = vadd.f32 0.0, %v497
      %v499 = vpop.f32.mrf.mxu0
      %v500 = vpop.f32.mrf.mxu0
      %v501 = vadd.f32 0.0, %v500
      %v502 = vpop.f32.mrf.mxu0
      %503 = vmatprep.mubr.bf16.mxu0 0
      %504 = vmatmul.mubr.bf16.gmra.mxu0 %v385
      %v505 = vpop.f32.mrf.mxu0
      %v506 = vadd.f32 0.0, %v505
      %v507 = vpop.f32.mrf.mxu0
      %v508 = vpop.f32.mrf.mxu0
      %v509 = vadd.f32 0.0, %v508
      %v510 = vpop.f32.mrf.mxu0
      %511 = vmatprep.mubr.bf16.mxu0 0
      %512 = vmatmul.mubr.bf16.gmra.mxu0 %v388
      %v513 = vpop.f32.mrf.mxu0
      %v514 = vadd.f32 0.0, %v513
      %v515 = vpop.f32.mrf.mxu0
      %v516 = vpop.f32.mrf.mxu0
      %v517 = vadd.f32 0.0, %v516
      %v518 = vpop.f32.mrf.mxu0
      %519 = vmatprep.mubr.bf16.mxu0 0
      %520 = vmatmul.mubr.bf16.gmra.mxu0 %v391
      %v521 = vpop.f32.mrf.mxu0
      %v522 = vadd.f32 0.0, %v521
      %v523 = vpop.f32.mrf.mxu0
      %v524 = vpop.f32.mrf.mxu0
      %v525 = vadd.f32 0.0, %v524
      %v526 = vpop.f32.mrf.mxu0
      %527 = vmatprep.mubr.bf16.mxu0 0
      %528 = vmatmul.mubr.bf16.gmra.mxu0 %v394
      %v529 = vpop.f32.mrf.mxu0
      %v530 = vadd.f32 0.0, %v529
      %v531 = vpop.f32.mrf.mxu0
      %v532 = vpop.f32.mrf.mxu0
      %v533 = vadd.f32 0.0, %v532
      %v534 = vpop.f32.mrf.mxu0
      %535 = vmatprep.mubr.bf16.mxu0 0
      %536 = vmatmul.mubr.bf16.gmra.mxu0 %v397
      %v537 = vpop.f32.mrf.mxu0
      %v538 = vadd.f32 0.0, %v537
      %v539 = vpop.f32.mrf.mxu0
      %v540 = vpop.f32.mrf.mxu0
      %v541 = vadd.f32 0.0, %v540
      %v542 = vpop.f32.mrf.mxu0
      %543 = vmatprep.mubr.bf16.mxu0 0
      %544 = vmatmul.mubr.bf16.gmra.mxu0 %v400
      %v545 = vpop.f32.mrf.mxu0
      %v546 = vadd.f32 0.0, %v545
      %v547 = vpop.f32.mrf.mxu0
      %v548 = vpop.f32.mrf.mxu0
      %v549 = vadd.f32 0.0, %v548
      %v550 = vpop.f32.mrf.mxu0
      %551 = vmatprep.mubr.bf16.mxu0 0
      %552 = vmatmul.mubr.bf16.gmra.mxu0 %v403
      %v553 = vpop.f32.mrf.mxu0
      %v554 = vadd.f32 0.0, %v553
      %v555 = vpop.f32.mrf.mxu0
      %v556 = vpop.f32.mrf.mxu0
      %v557 = vadd.f32 0.0, %v556
      %v558 = vpop.f32.mrf.mxu0
      %559 = vmatprep.mubr.bf16.mxu0 0
      %560 = vmatmul.mubr.bf16.gmra.mxu0 %v406
      %v561 = vpop.f32.mrf.mxu0
      %v562 = vadd.f32 0.0, %v561
      %v563 = vpop.f32.mrf.mxu0
      %v564 = vpop.f32.mrf.mxu0
      %v565 = vadd.f32 0.0, %v564
      %v566 = vpop.f32.mrf.mxu0
      %567 = vmatprep.mubr.bf16.mxu0 0
      %568 = vmatmul.mubr.bf16.gmra.mxu0 %v409
      %v569 = vpop.f32.mrf.mxu0
      %v570 = vadd.f32 0.0, %v569
      %v571 = vpop.f32.mrf.mxu0
      %v572 = vpop.f32.mrf.mxu0
      %v573 = vadd.f32 0.0, %v572
      %v574 = vpop.f32.mrf.mxu0
      %575 = vdwg.mxu0
      %v576 = vld [vmem:[%s3] sm:$0x1]
      %v578 = vlaneseq
      %v579 = vshrl.u32 %v578, 7
      %v580 = vsub.s32 0, %v579
      %v581 = vrot.slane %v576, %v580
      %v583 = vmul.f32 %v450, %v581
      %v584 = vmul.f32 %v453, %v581
      %v585 = vmul.f32 %v458, %v581
      %v586 = vmul.f32 %v461, %v581
      %v587 = vmul.f32 %v466, %v581
      %v588 = vmul.f32 %v469, %v581
      %v589 = vmul.f32 %v474, %v581
      %v590 = vmul.f32 %v477, %v581
      %v591 = vmul.f32 %v482, %v581
      %v592 = vmul.f32 %v485, %v581
      %v593 = vmul.f32 %v490, %v581
      %v594 = vmul.f32 %v493, %v581
      %v595 = vmul.f32 %v498, %v581
      %v596 = vmul.f32 %v501, %v581
      %v597 = vmul.f32 %v506, %v581
      %v598 = vmul.f32 %v509, %v581
      %v599 = vmul.f32 %v514, %v581
      %v600 = vmul.f32 %v517, %v581
      %v601 = vmul.f32 %v522, %v581
      %v602 = vmul.f32 %v525, %v581
      %v603 = vmul.f32 %v530, %v581
      %v604 = vmul.f32 %v533, %v581
      %v605 = vmul.f32 %v538, %v581
      %v606 = vmul.f32 %v541, %v581
      %v607 = vmul.f32 %v546, %v581
      %v608 = vmul.f32 %v549, %v581
      %v609 = vmul.f32 %v554, %v581
      %v610 = vmul.f32 %v557, %v581
      %v611 = vmul.f32 %v562, %v581
      %v612 = vmul.f32 %v565, %v581
      %v613 = vmul.f32 %v570, %v581
      %v614 = vmul.f32 %v573, %v581
      %v615 = vld [vmem:[%s4] sm:$0x1]
      %v617 = vlaneseq
      %v618 = vshrl.u32 %v617, 7
      %v619 = vsub.s32 0, %v618
      %v620 = vrot.slane %v615, %v619
      %v622 = vadd.f32 %v583, %v620
      %v623 = vadd.f32 %v584, %v620
      %v624 = vadd.f32 %v585, %v620
      %v625 = vadd.f32 %v586, %v620
      %v626 = vadd.f32 %v587, %v620
      %v627 = vadd.f32 %v588, %v620
      %v628 = vadd.f32 %v589, %v620
      %v629 = vadd.f32 %v590, %v620
      %v630 = vadd.f32 %v591, %v620
      %v631 = vadd.f32 %v592, %v620
      %v632 = vadd.f32 %v593, %v620
      %v633 = vadd.f32 %v594, %v620
      %v634 = vadd.f32 %v595, %v620
      %v635 = vadd.f32 %v596, %v620
      %v636 = vadd.f32 %v597, %v620
      %v637 = vadd.f32 %v598, %v620
      %v638 = vadd.f32 %v599, %v620
      %v639 = vadd.f32 %v600, %v620
      %v640 = vadd.f32 %v601, %v620
      %v641 = vadd.f32 %v602, %v620
      %v642 = vadd.f32 %v603, %v620
      %v643 = vadd.f32 %v604, %v620
      %v644 = vadd.f32 %v605, %v620
      %v645 = vadd.f32 %v606, %v620
      %v646 = vadd.f32 %v607, %v620
      %v647 = vadd.f32 %v608, %v620
      %v648 = vadd.f32 %v609, %v620
      %v649 = vadd.f32 %v610, %v620
      %v650 = vadd.f32 %v611, %v620
      %v651 = vadd.f32 %v612, %v620
      %v652 = vadd.f32 %v613, %v620
      %v653 = vadd.f32 %v614, %v620
      %s654 = sld [smem:[#allocation2]]
      %v655 = vmax.f32 %v622, 0.0
      %v656 = vmax.f32 %v623, 0.0
      %v657 = vmax.f32 %v624, 0.0
      %v658 = vmax.f32 %v625, 0.0
      %v659 = vmax.f32 %v626, 0.0
      %v660 = vmax.f32 %v627, 0.0
      %v661 = vmax.f32 %v628, 0.0
      %v662 = vmax.f32 %v629, 0.0
      %v663 = vmax.f32 %v630, 0.0
      %v664 = vmax.f32 %v631, 0.0
      %v665 = vmax.f32 %v632, 0.0
      %v666 = vmax.f32 %v633, 0.0
      %v667 = vmax.f32 %v634, 0.0
      %v668 = vmax.f32 %v635, 0.0
      %v669 = vmax.f32 %v636, 0.0
      %v670 = vmax.f32 %v637, 0.0
      %v671 = vmax.f32 %v638, 0.0
      %v672 = vmax.f32 %v639, 0.0
      %v673 = vmax.f32 %v640, 0.0
      %v674 = vmax.f32 %v641, 0.0
      %v675 = vmax.f32 %v642, 0.0
      %v676 = vmax.f32 %v643, 0.0
      %v677 = vmax.f32 %v644, 0.0
      %v678 = vmax.f32 %v645, 0.0
      %v679 = vmax.f32 %v646, 0.0
      %v680 = vmax.f32 %v647, 0.0
      %v681 = vmax.f32 %v648, 0.0
      %v682 = vmax.f32 %v649, 0.0
      %v683 = vmax.f32 %v650, 0.0
      %v684 = vmax.f32 %v651, 0.0
      %v685 = vmax.f32 %v652, 0.0
      %v686 = vmax.f32 %v653, 0.0
      %v687 = vmin.f32 %v622, 0.0
      %v688 = vmin.f32 %v623, 0.0
      %v689 = vmin.f32 %v624, 0.0
      %v690 = vmin.f32 %v625, 0.0
      %v691 = vmin.f32 %v626, 0.0
      %v692 = vmin.f32 %v627, 0.0
      %v693 = vmin.f32 %v628, 0.0
      %v694 = vmin.f32 %v629, 0.0
      %v695 = vmin.f32 %v630, 0.0
      %v696 = vmin.f32 %v631, 0.0
      %v697 = vmin.f32 %v632, 0.0
      %v698 = vmin.f32 %v633, 0.0
      %v699 = vmin.f32 %v634, 0.0
      %v700 = vmin.f32 %v635, 0.0
      %v701 = vmin.f32 %v636, 0.0
      %v702 = vmin.f32 %v637, 0.0
      %v703 = vmin.f32 %v638, 0.0
      %v704 = vmin.f32 %v639, 0.0
      %v705 = vmin.f32 %v640, 0.0
      %v706 = vmin.f32 %v641, 0.0
      %v707 = vmin.f32 %v642, 0.0
      %v708 = vmin.f32 %v643, 0.0
      %v709 = vmin.f32 %v644, 0.0
      %v710 = vmin.f32 %v645, 0.0
      %v711 = vmin.f32 %v646, 0.0
      %v712 = vmin.f32 %v647, 0.0
      %v713 = vmin.f32 %v648, 0.0
      %v714 = vmin.f32 %v649, 0.0
      %v715 = vmin.f32 %v650, 0.0
      %v716 = vmin.f32 %v651, 0.0
      %v717 = vmin.f32 %v652, 0.0
      %v718 = vmin.f32 %v653, 0.0
      %v719 = vstv %s654
      %v720 = vmul.f32 %v719, %v687
      %v721 = vmul.f32 %v719, %v688
      %v722 = vmul.f32 %v719, %v689
      %v723 = vmul.f32 %v719, %v690
      %v724 = vmul.f32 %v719, %v691
      %v725 = vmul.f32 %v719, %v692
      %v726 = vmul.f32 %v719, %v693
      %v727 = vmul.f32 %v719, %v694
      %v728 = vmul.f32 %v719, %v695
      %v729 = vmul.f32 %v719, %v696
      %v730 = vmul.f32 %v719, %v697
      %v731 = vmul.f32 %v719, %v698
      %v732 = vmul.f32 %v719, %v699
      %v733 = vmul.f32 %v719, %v700
      %v734 = vmul.f32 %v719, %v701
      %v735 = vmul.f32 %v719, %v702
      %v736 = vmul.f32 %v719, %v703
      %v737 = vmul.f32 %v719, %v704
      %v738 = vmul.f32 %v719, %v705
      %v739 = vmul.f32 %v719, %v706
      %v740 = vmul.f32 %v719, %v707
      %v741 = vmul.f32 %v719, %v708
      %v742 = vmul.f32 %v719, %v709
      %v743 = vmul.f32 %v719, %v710
      %v744 = vmul.f32 %v719, %v711
      %v745 = vmul.f32 %v719, %v712
      %v746 = vmul.f32 %v719, %v713
      %v747 = vmul.f32 %v719, %v714
      %v748 = vmul.f32 %v719, %v715
      %v749 = vmul.f32 %v719, %v716
      %v750 = vmul.f32 %v719, %v717
      %v751 = vmul.f32 %v719, %v718
      %v752 = vadd.f32 %v655, %v720
      %v753 = vadd.f32 %v656, %v721
      %v754 = vadd.f32 %v657, %v722
      %v755 = vadd.f32 %v658, %v723
      %v756 = vadd.f32 %v659, %v724
      %v757 = vadd.f32 %v660, %v725
      %v758 = vadd.f32 %v661, %v726
      %v759 = vadd.f32 %v662, %v727
      %v760 = vadd.f32 %v663, %v728
      %v761 = vadd.f32 %v664, %v729
      %v762 = vadd.f32 %v665, %v730
      %v763 = vadd.f32 %v666, %v731
      %v764 = vadd.f32 %v667, %v732
      %v765 = vadd.f32 %v668, %v733
      %v766 = vadd.f32 %v669, %v734
      %v767 = vadd.f32 %v670, %v735
      %v768 = vadd.f32 %v671, %v736
      %v769 = vadd.f32 %v672, %v737
      %v770 = vadd.f32 %v673, %v738
      %v771 = vadd.f32 %v674, %v739
      %v772 = vadd.f32 %v675, %v740
      %v773 = vadd.f32 %v676, %v741
      %v774 = vadd.f32 %v677, %v742
      %v775 = vadd.f32 %v678, %v743
      %v776 = vadd.f32 %v679, %v744
      %v777 = vadd.f32 %v680, %v745
      %v778 = vadd.f32 %v681, %v746
      %v779 = vadd.f32 %v682, %v747
      %v780 = vadd.f32 %v683, %v748
      %v781 = vadd.f32 %v684, %v749
      %v782 = vadd.f32 %v685, %v750
      %v783 = vadd.f32 %v686, %v751
      %v784 = vpack.c.bf16 %v753, %v752
      %v785 = vpack.c.bf16 %v755, %v754
      %v786 = vpack.c.bf16 %v757, %v756
      %v787 = vpack.c.bf16 %v759, %v758
      %v788 = vpack.c.bf16 %v761, %v760
      %v789 = vpack.c.bf16 %v763, %v762
      %v790 = vpack.c.bf16 %v765, %v764
      %v791 = vpack.c.bf16 %v767, %v766
      %v792 = vpack.c.bf16 %v769, %v768
      %v793 = vpack.c.bf16 %v771, %v770
      %v794 = vpack.c.bf16 %v773, %v772
      %v795 = vpack.c.bf16 %v775, %v774
      %v796 = vpack.c.bf16 %v777, %v776
      %v797 = vpack.c.bf16 %v779, %v778
      %v798 = vpack.c.bf16 %v781, %v780
      %v799 = vpack.c.bf16 %v783, %v782
      %v816 = vunpack.c.l.b16 %v784
      %v817 = vunpack.c.h.b16 %v784
      %v818 = vunpack.c.l.b16 %v785
      %v819 = vunpack.c.h.b16 %v785
      %v820 = vunpack.c.l.b16 %v786
      %v821 = vunpack.c.h.b16 %v786
      %v822 = vunpack.c.l.b16 %v787
      %v823 = vunpack.c.h.b16 %v787
      %v824 = vunpack.c.l.b16 %v788
      %v825 = vunpack.c.h.b16 %v788
      %v826 = vunpack.c.l.b16 %v789
      %v827 = vunpack.c.h.b16 %v789
      %v828 = vunpack.c.l.b16 %v790
      %v829 = vunpack.c.h.b16 %v790
      %v830 = vunpack.c.l.b16 %v791
      %v831 = vunpack.c.h.b16 %v791
      %v832 = vunpack.c.l.b16 %v792
      %v833 = vunpack.c.h.b16 %v792
      %v834 = vunpack.c.l.b16 %v793
      %v835 = vunpack.c.h.b16 %v793
      %v836 = vunpack.c.l.b16 %v794
      %v837 = vunpack.c.h.b16 %v794
      %v838 = vunpack.c.l.b16 %v795
      %v839 = vunpack.c.h.b16 %v795
      %v840 = vunpack.c.l.b16 %v796
      %v841 = vunpack.c.h.b16 %v796
      %v842 = vunpack.c.l.b16 %v797
      %v843 = vunpack.c.h.b16 %v797
      %v844 = vunpack.c.l.b16 %v798
      %v845 = vunpack.c.h.b16 %v798
      %v846 = vunpack.c.l.b16 %v799
      %v847 = vunpack.c.h.b16 %v799
      %v848 = vpack.c.b16 %v816, %v816
      %v849 = vpack.c.b16 %v817, %v817
      %v850 = vpack.c.b16 %v818, %v818
      %v851 = vpack.c.b16 %v819, %v819
      %v852 = vpack.c.b16 %v820, %v820
      %v853 = vpack.c.b16 %v821, %v821
      %v854 = vpack.c.b16 %v822, %v822
      %v855 = vpack.c.b16 %v823, %v823
      %v856 = vpack.c.b16 %v824, %v824
      %v857 = vpack.c.b16 %v825, %v825
      %v858 = vpack.c.b16 %v826, %v826
      %v859 = vpack.c.b16 %v827, %v827
      %v860 = vpack.c.b16 %v828, %v828
      %v861 = vpack.c.b16 %v829, %v829
      %v862 = vpack.c.b16 %v830, %v830
      %v863 = vpack.c.b16 %v831, %v831
      %v864 = vpack.c.b16 %v832, %v832
      %v865 = vpack.c.b16 %v833, %v833
      %v866 = vpack.c.b16 %v834, %v834
      %v867 = vpack.c.b16 %v835, %v835
      %v868 = vpack.c.b16 %v836, %v836
      %v869 = vpack.c.b16 %v837, %v837
      %v870 = vpack.c.b16 %v838, %v838
      %v871 = vpack.c.b16 %v839, %v839
      %v872 = vpack.c.b16 %v840, %v840
      %v873 = vpack.c.b16 %v841, %v841
      %v874 = vpack.c.b16 %v842, %v842
      %v875 = vpack.c.b16 %v843, %v843
      %v876 = vpack.c.b16 %v844, %v844
      %v877 = vpack.c.b16 %v845, %v845
      %v878 = vpack.c.b16 %v846, %v846
      %v879 = vpack.c.b16 %v847, %v847
      %912 = vst [vmem:[%s227] sm:$0xf] %v848
      %913 = vst [vmem:[%s227 + $0x4] sm:$0xf] %v849
      %914 = vst [vmem:[%s227 + $0x8] sm:$0xf] %v850
      %915 = vst [vmem:[%s227 + $0xc] sm:$0xf] %v851
      %916 = vst [vmem:[%s227 + $0x10] sm:$0xf] %v852
      %917 = vst [vmem:[%s227 + $0x14] sm:$0xf] %v853
      %918 = vst [vmem:[%s227 + $0x18] sm:$0xf] %v854
      %919 = vst [vmem:[%s227 + $0x1c] sm:$0xf] %v855
      %920 = vst [vmem:[%s227 + $0x20] sm:$0xf] %v856
      %921 = vst [vmem:[%s227 + $0x24] sm:$0xf] %v857
      %922 = vst [vmem:[%s227 + $0x28] sm:$0xf] %v858
      %923 = vst [vmem:[%s227 + $0x2c] sm:$0xf] %v859
      %924 = vst [vmem:[%s227 + $0x30] sm:$0xf] %v860
      %925 = vst [vmem:[%s227 + $0x34] sm:$0xf] %v861
      %926 = vst [vmem:[%s227 + $0x38] sm:$0xf] %v862
      %927 = vst [vmem:[%s227 + $0x3c] sm:$0xf] %v863
      %928 = vst [vmem:[%s227 + $0x40] sm:$0xf] %v864
      %929 = vst [vmem:[%s227 + $0x44] sm:$0xf] %v865
      %930 = vst [vmem:[%s227 + $0x48] sm:$0xf] %v866
      %931 = vst [vmem:[%s227 + $0x4c] sm:$0xf] %v867
      %932 = vst [vmem:[%s227 + $0x50] sm:$0xf] %v868
      %933 = vst [vmem:[%s227 + $0x54] sm:$0xf] %v869
      %934 = vst [vmem:[%s227 + $0x58] sm:$0xf] %v870
      %935 = vst [vmem:[%s227 + $0x5c] sm:$0xf] %v871
      %936 = vst [vmem:[%s227 + $0x60] sm:$0xf] %v872
      %937 = vst [vmem:[%s227 + $0x64] sm:$0xf] %v873
      %938 = vst [vmem:[%s227 + $0x68] sm:$0xf] %v874
      %939 = vst [vmem:[%s227 + $0x6c] sm:$0xf] %v875
      %940 = vst [vmem:[%s227 + $0x70] sm:$0xf] %v876
      %941 = vst [vmem:[%s227 + $0x74] sm:$0xf] %v877
      %942 = vst [vmem:[%s227 + $0x78] sm:$0xf] %v878
      %943 = vst [vmem:[%s227 + $0x7c] sm:$0xf] %v879
      %s944 = smul.u32 32, %s17
      %p945 = scmp.lt.s32.totalorder %s944, 63
      %s946 = scalar_select %p945, %s944, 63
      %s947 = smul.addr %s946, 4
      %s948 = scalar_lea.vmem %s5, %s947
      // Predicated region
      $region41: #{cbr_forward.3} parent=39 // pred_check
        %p949 = pneg %p145
      $region42: #{cbr_forward.3} parent=39 // pred_check_branch
        %951 = sbr.rel (%p949) target = $region44
      $region43: #{cbr_forward.3} parent=39 // pred_region
        %s952 = smul.u32 32, %s17
      $region44: #{cbr_forward.3} parent=39 // pred_fallthru
        _
    $region40: #{cbr_forward.3} parent=5 // pred_fallthru
      _
    %p953 = scmp.le.s32.totalorder 2, %s12
    // Predicated region
    $region45: #{cbr_forward.3} parent=5 // pred_check
      %p954 = pneg %p953
    $region46: #{cbr_forward.3} parent=5 // pred_check_branch
      %956 = sbr.rel (%p954) target = $region48
    $region47: #{cbr_forward.3} parent=5 // pred_region
      %s957 = ssub.s32 %s12, 2
      // Predicated region
      $region49: #{cbr_forward.3} parent=47 // pred_check
        %p958 = pneg %p151
      $region50: #{cbr_forward.3} parent=47 // pred_check_branch
        %960 = sbr.rel (%p958) target = $region52
      $region51: #{cbr_forward.3} parent=47 // pred_region
        %s961 = smul.u32 32, %s18
        %p962 = scmp.lt.s32.totalorder %s961, 63
        %s963 = scalar_select %p962, %s961, 63
        %s964 = smul.addr %s963, 4
        %s965 = scalar_lea.vmem %s5, %s964
      $region52: #{cbr_forward.3} parent=47 // pred_fallthru
        _
    $region48: #{cbr_forward.3} parent=5 // pred_fallthru
      _
  $region6: #{cbr_forward.3} parent=0 // loop_footer
    %s16 = sadd.s32 1, %s12
  $region7: #{cbr_forward.3} parent=0 // loop_footer_branch
    %11 = sbr.rel target = $region3
  $region8: #{cbr_forward.3} parent=0 // loop_exit
    _

</llo_original>
